<compile_context>
chip_gen: v6e
topology: v6e:2x2x1
jax: 0.10.0
libtpu: 0.0.40
codegen_flags: <defaults>
</compile_context>

<pallas_src>
import functools
import math

import jax
import jax.numpy as jnp
from jax.experimental import pallas as pl
from jax.experimental.pallas import tpu as pltpu


# ----------------------------- kernel ----------------------------------------

def _layernorm(x, gamma, beta, eps=1e-5):
    mean = jnp.mean(x, axis=-1, keepdims=True)
    var = jnp.mean((x - mean) ** 2, axis=-1, keepdims=True)
    return (x - mean) * jax.lax.rsqrt(var + eps) * gamma + beta


def fused_encoder_kernel(x_ref, wqkv_ref, bqkv_ref, wo_ref, bo_ref,
                         ln1g_ref, ln1b_ref,
                         w1_ref, b1_ref, w2_ref, b2_ref,
                         ln2g_ref, ln2b_ref,
                         lnfg_ref, lnfb_ref,
                         o_ref,
                         x1_ref, ff_ref,
                         *, bb, seq, d_model, n_heads, approx_recip):
    """Grid = (batch_block, layer, ff_tile).

    o_ref doubles as the resident (bb, S, D) activation across the whole
    (layer, ff_tile) sweep of one batch block; x1_ref holds the post-LN1
    activation across ff tiles and ff_ref accumulates the second FFN matmul.
    """
    l = pl.program_id(1)
    t = pl.program_id(2)
    n_layers = pl.num_programs(1)
    n_ff = pl.num_programs(2)
    dh = d_model // n_heads
    rows = bb * seq
    scale = 1.0 / math.sqrt(dh)

    # --- first step of this batch block: load (x + pe) into the resident
    #     activation (the output block, which stays in VMEM across layers).
    @pl.when((l == 0) & (t == 0))
    def _init_activation():
        o_ref[...] = x_ref[...]

    # --- per layer, first ff tile: multi-head self-attention + LN1 ----------
    @pl.when(t == 0)
    def _attention():
        # Leading-dim reshape only (last dim untouched -> no lane relayout).
        x2 = o_ref[...].reshape(rows, d_model)                    # (rows, D) f32
        xb = x2.astype(jnp.bfloat16)
        # Fused QKV: one (rows, D) @ (D, 3D) bf16 matmul, f32 accumulation.
        qkv = jnp.dot(xb, wqkv_ref[0],
                      preferred_element_type=jnp.float32) + bqkv_ref[0]
        wo = wo_ref[0]                                            # (D, D) bf16

        attn = None
        for h in range(n_heads):                                  # static unroll
            q = qkv[:, h * dh:(h + 1) * dh]
            k = qkv[:, d_model + h * dh: d_model + (h + 1) * dh]
            v = qkv[:, 2 * d_model + h * dh: 2 * d_model + (h + 1) * dh]
            q3 = q.reshape(bb, seq, dh).astype(jnp.bfloat16)
            k3 = k.reshape(bb, seq, dh).astype(jnp.bfloat16)
            v3 = v.reshape(bb, seq, dh).astype(jnp.bfloat16)
            # TODO(synk): attention-mask path not wired (forward uses
            # mask=None); for long S, tile keys with online softmax instead
            # of materializing the (bb, S, S) score block.
            s = jnp.einsum('bqd,bkd->bqk', q3, k3,
                           preferred_element_type=jnp.float32) * scale
            s = s - jnp.max(s, axis=-1, keepdims=True)
            p = jnp.exp(s)
            denom = jnp.sum(p, axis=-1, keepdims=True)
            if approx_recip:
                p = p * pl.reciprocal(denom, approx=True)   # EUP slot (~free)
            else:
                p = p / denom
            ctx = jnp.einsum('bqk,bkd->bqd', p.astype(jnp.bfloat16), v3,
                             preferred_element_type=jnp.float32)
            ctx2 = ctx.reshape(rows, dh).astype(jnp.bfloat16)
            # Fold this head through its slice of the output projection:
            # sum_h ctx_h @ Wo[h*dh:(h+1)*dh, :] == concat(ctx_h) @ Wo.
            contrib = jnp.dot(ctx2, wo[h * dh:(h + 1) * dh, :],
                              preferred_element_type=jnp.float32)
            attn = contrib if attn is None else attn + contrib

        attn = attn + bo_ref[0]
        # dropout = identity (eval mode); residual + LayerNorm1 (f32 math).
        x1_ref[...] = _layernorm(attn + x2, ln1g_ref[0], ln1b_ref[0])

    # --- FFN, tiled over d_ff (runs on every grid step) ----------------------
    x1b = x1_ref[...].astype(jnp.bfloat16)
    hid = jnp.dot(x1b, w1_ref[0], preferred_element_type=jnp.float32) + b1_ref[0]
    hid = jnp.maximum(hid, 0.0)
    contrib = jnp.dot(hid.astype(jnp.bfloat16), w2_ref[0],
                      preferred_element_type=jnp.float32)

    @pl.when(t == 0)                     # write-on-first: no zero-fill pass
    def _ff_first():
        ff_ref[...] = contrib

    @pl.when(t > 0)
    def _ff_accumulate():
        ff_ref[...] = ff_ref[...] + contrib

    # --- last ff tile: bias + residual + LN2 (+ final LN on the last layer) --
    def _layer_out():
        ff = ff_ref[...] + b2_ref[0]
        return _layernorm(ff + x1_ref[...], ln2g_ref[0], ln2b_ref[0])

    @pl.when((t == n_ff - 1) & (l < n_layers - 1))
    def _store_activation():
        o_ref[...] = _layer_out().reshape(bb, seq, d_model)

    @pl.when((t == n_ff - 1) & (l == n_layers - 1))
    def _store_final():
        y = _layernorm(_layer_out(), lnfg_ref[...], lnfb_ref[...])
        o_ref[...] = y.reshape(bb, seq, d_model).astype(o_ref.dtype)


# ----------------------------- wrapper ----------------------------------------

def _pick_vmem_limit_bytes():
    """Generation-aware VMEM budget: ~75% of physical, capped, with headroom
    for compiler scratch and pipeline double buffers."""
    try:
        phys = int(pltpu.get_tpu_info().vmem_capacity_bytes)
    except Exception:
        phys = 64 * 1024 * 1024          # conservative default (v7x per-core)
    return max(16 * 1024 * 1024, min((phys * 3) // 4, 112 * 1024 * 1024))


def _pick_ff_tile(d_ff):
    for t in (512, 256, 128):            # 128-lane multiples
        if d_ff % t == 0:
            return t
    return d_ff                          # small / unpadded d_ff: one full tile


def transformer_encoder(x, params, n_heads, *, tile_ff=None, batch_blocks=None,
                        approx_recip=True):
    B, S, D = x.shape
    L = params["wqkv"].shape[0]
    d_ff = params["w1"].shape[2]
    assert D % n_heads == 0

    if tile_ff is None:
        tile_ff = _pick_ff_tile(d_ff)
    assert d_ff % tile_ff == 0 and (tile_ff == d_ff or tile_ff % 128 == 0)
    n_ff = d_ff // tile_ff

    if batch_blocks is None:
        batch_blocks = 2 if (B % 2 == 0 and B >= 2) else 1
    assert B % batch_blocks == 0
    bb = B // batch_blocks

    # Fold positional encoding on the host: the kernel streams a single
    # pre-added input block per batch block (read exactly once, no pinned pe).
    x_pe = (x + params["pe"][:S][None]).astype(jnp.float32)

    per_batch3 = lambda b, l, t: (b, 0, 0)
    per_layer3 = lambda b, l, t: (l, 0, 0)
    w1_map = lambda b, l, t: (l, 0, t)
    w2_map = lambda b, l, t: (l, t, 0)
    full2 = lambda b, l, t: (0, 0)

    in_specs = [
        pl.BlockSpec((bb, S, D), per_batch3),            # x + pe
        pl.BlockSpec((1, D, 3 * D), per_layer3),         # fused Wqkv (bf16)
        pl.BlockSpec((1, 1, 3 * D), per_layer3),         # fused bqkv
        pl.BlockSpec((1, D, D), per_layer3),             # Wo (bf16)
        pl.BlockSpec((1, 1, D), per_layer3),             # bo
        pl.BlockSpec((1, 1, D), per_layer3),             # ln1 gamma
        pl.BlockSpec((1, 1, D), per_layer3),             # ln1 beta
        pl.BlockSpec((1, D, tile_ff), w1_map),           # W1 tile (bf16)
        pl.BlockSpec((1, 1, tile_ff), w1_map),           # b1 tile
        pl.BlockSpec((1, tile_ff, D), w2_map),           # W2 tile (bf16)
        pl.BlockSpec((1, 1, D), per_layer3),             # b2
        pl.BlockSpec((1, 1, D), per_layer3),             # ln2 gamma
        pl.BlockSpec((1, 1, D), per_layer3),             # ln2 beta
        pl.BlockSpec((1, D), full2),                     # final LN gamma
        pl.BlockSpec((1, D), full2),                     # final LN beta
    ]

    kernel = functools.partial(fused_encoder_kernel, bb=bb, seq=S, d_model=D,
                               n_heads=n_heads, approx_recip=approx_recip)

    return pl.pallas_call(
        kernel,
        out_shape=jax.ShapeDtypeStruct((B, S, D), x.dtype),
        grid_spec=pltpu.PrefetchScalarGridSpec(
            num_scalar_prefetch=0,
            grid=(batch_blocks, L, n_ff),
            in_specs=in_specs,
            out_specs=pl.BlockSpec((bb, S, D), per_batch3),
            scratch_shapes=[
                pltpu.VMEM((bb * S, D), jnp.float32),    # x1 (post-LN1)
                pltpu.VMEM((bb * S, D), jnp.float32),    # FFN accumulator
            ],
        ),
        compiler_params=pltpu.CompilerParams(
            # batch axis is carry-free -> "parallel" (2 TCs on v7x);
            # layer / ff axes carry the resident activation -> "arbitrary".
            dimension_semantics=("parallel", "arbitrary", "arbitrary"),
            vmem_limit_bytes=_pick_vmem_limit_bytes(),
        ),
    )(x_pe,
      params["wqkv"], params["bqkv"], params["wo"], params["bo"],
      params["ln1_g"], params["ln1_b"],
      params["w1"], params["b1"], params["w2"], params["b2"],
      params["ln2_g"], params["ln2_b"],
      params["lnf_g"], params["lnf_b"])


# ----------------------------- params / reference -----------------------------

def sinusoidal_pe(max_len, d_model):
    pos = jnp.arange(max_len, dtype=jnp.float32)[:, None]
    i = jnp.arange(0, d_model, 2, dtype=jnp.float32)[None, :]
    div = jnp.exp(-i * (math.log(10000.0) / d_model))
    ang = pos * div
    pe = jnp.zeros((max_len, d_model), jnp.float32)
    pe = pe.at[:, 0::2].set(jnp.sin(ang))
    pe = pe.at[:, 1::2].set(jnp.cos(ang))
    return pe


def init_params(key, d_model, n_heads, d_ff, num_layers, max_len):
    """Matmul weights stored pre-transposed vs PyTorch (y = x @ W + b,
    W = W_pt.T) in bf16; Q/K/V fused column-wise into one (D, 3*D) matrix."""
    L = num_layers
    ks = jax.random.split(key, 10)

    def nrm(k, shape):
        return jax.random.normal(k, shape, jnp.float32) * 0.02

    wq = nrm(ks[0], (L, d_model, d_model))
    wk = nrm(ks[1], (L, d_model, d_model))
    wv = nrm(ks[2], (L, d_model, d_model))
    wqkv = jnp.concatenate([wq, wk, wv], axis=-1).astype(jnp.bfloat16)

    return {
        "wqkv": wqkv,                                             # (L, D, 3D) bf16
        "bqkv": nrm(ks[3], (L, 1, 3 * d_model)),
        "wo": nrm(ks[4], (L, d_model, d_model)).astype(jnp.bfloat16),
        "bo": nrm(ks[5], (L, 1, d_model)),
        "ln1_g": jnp.ones((L, 1, d_model), jnp.float32),
        "ln1_b": jnp.zeros((L, 1, d_model), jnp.float32),
        "w1": nrm(ks[6], (L, d_model, d_ff)).astype(jnp.bfloat16),
        "b1": nrm(ks[7], (L, 1, d_ff)),
        "w2": nrm(ks[8], (L, d_ff, d_model)).astype(jnp.bfloat16),
        "b2": nrm(ks[9], (L, 1, d_model)),
        "ln2_g": jnp.ones((L, 1, d_model), jnp.float32),
        "ln2_b": jnp.zeros((L, 1, d_model), jnp.float32),
        "lnf_g": jnp.ones((1, d_model), jnp.float32),
        "lnf_b": jnp.zeros((1, d_model), jnp.float32),
        "pe": sinusoidal_pe(max_len, d_model),
    }


def reference_forward(x, params, n_heads):
    """Pure-JAX reference matching the PyTorch module (eval mode, mask=None),
    f32 math with the same bf16-stored weights upcast to f32."""
    B, S, D = x.shape
    L = params["wqkv"].shape[0]
    dh = D // n_heads
    f32 = lambda a: a.astype(jnp.float32)

    def ln(v, g, b, eps=1e-5):
        m = v.mean(-1, keepdims=True)
        var = ((v - m) ** 2).mean(-1, keepdims=True)
        return (v - m) / jnp.sqrt(var + eps) * g + b

    h = x + params["pe"][:S][None]
    for l in range(L):
        qkv = h @ f32(params["wqkv"][l]) + params["bqkv"][l]
        q, k, v = qkv[..., :D], qkv[..., D:2 * D], qkv[..., 2 * D:]
        qh = q.reshape(B, S, n_heads, dh).transpose(0, 2, 1, 3)
        kh = k.reshape(B, S, n_heads, dh).transpose(0, 2, 1, 3)
        vh = v.reshape(B, S, n_heads, dh).transpose(0, 2, 1, 3)
        s = jnp.einsum('bhqe,bhke->bhqk', qh, kh) / math.sqrt(dh)
        p = jax.nn.softmax(s, axis=-1)
        ctx = jnp.einsum('bhqk,bhke->bhqe', p, vh)
        ctx = ctx.transpose(0, 2, 1, 3).reshape(B, S, D)
        attn = ctx @ f32(params["wo"][l]) + params["bo"][l]
        x1 = ln(attn + h, params["ln1_g"][l], params["ln1_b"][l])
        hid = jnp.maximum(x1 @ f32(params["w1"][l]) + params["b1"][l], 0.0)
        ff = hid @ f32(params["w2"][l]) + params["b2"][l]
        h = ln(ff + x1, params["ln2_g"][l], params["ln2_b"][l])
    return ln(h, params["lnf_g"], params["lnf_b"])


# ------------------------------- main ------------------------------------------

if __name__ == "__main__":
    d_model, n_heads, d_ff, num_layers = 32, 4, 256, 2
    batch, seq_len, max_len = 2, 8, 64

    key = jax.random.PRNGKey(0)
    kx, kp = jax.random.split(key)
    x = jax.random.normal(kx, (batch, seq_len, d_model), jnp.float32)
    params = init_params(kp, d_model, n_heads, d_ff, num_layers, max_len)

    # tile_ff=128 exercises the 2-tile FFN path; batch_blocks=2 exercises the
    # carry-free parallel batch axis.
    out = transformer_encoder(x, params, n_heads, tile_ff=128, batch_blocks=2)
    out = jax.block_until_ready(out)

    assert out.shape == (batch, seq_len, d_model)
    assert bool(jnp.all(jnp.isfinite(out)))
    ref = reference_forward(x, params, n_heads)
    assert bool(jnp.allclose(out, ref, atol=2e-2, rtol=2e-2)), \
        float(jnp.max(jnp.abs(out - ref)))
    print("KERNEL_OK")
</pallas_src>

<mosaic_0001>
module attributes {stable_mosaic.version = 11 : i64} {
  func.func @fused_encoder_kernel(%arg0: i32, %arg1: i32, %arg2: i32, %arg3: memref<1x8x32xf32, #tpu.memory_space<vmem>>, %arg4: memref<1x32x96xbf16, #tpu.memory_space<vmem>>, %arg5: memref<1x1x96xf32, #tpu.memory_space<vmem>>, %arg6: memref<1x32x32xbf16, #tpu.memory_space<vmem>>, %arg7: memref<1x1x32xf32, #tpu.memory_space<vmem>>, %arg8: memref<1x1x32xf32, #tpu.memory_space<vmem>>, %arg9: memref<1x1x32xf32, #tpu.memory_space<vmem>>, %arg10: memref<1x32x128xbf16, #tpu.memory_space<vmem>>, %arg11: memref<1x1x128xf32, #tpu.memory_space<vmem>>, %arg12: memref<1x128x32xbf16, #tpu.memory_space<vmem>>, %arg13: memref<1x1x32xf32, #tpu.memory_space<vmem>>, %arg14: memref<1x1x32xf32, #tpu.memory_space<vmem>>, %arg15: memref<1x1x32xf32, #tpu.memory_space<vmem>>, %arg16: memref<1x32xf32, #tpu.memory_space<vmem>>, %arg17: memref<1x32xf32, #tpu.memory_space<vmem>>, %arg18: memref<1x8x32xf32, #tpu.memory_space<vmem>>, %arg19: memref<8x32xf32, #tpu.memory_space<vmem>>, %arg20: memref<8x32xf32, #tpu.memory_space<vmem>>) attributes {dimension_semantics = [#tpu.dimension_semantics<parallel>, #tpu.dimension_semantics<arbitrary>, #tpu.dimension_semantics<arbitrary>], iteration_bounds = array<i64: 2, 2, 2>, scalar_prefetch = 0 : i64, scratch_operands = 2 : i64, tpu.core_type = #tpu.core_type<tc>, window_params = [{transform_indices = @transform_0, window_bounds = array<i64: 1, 8, 32>}, {transform_indices = @transform_1, window_bounds = array<i64: 1, 32, 96>}, {transform_indices = @transform_2, window_bounds = array<i64: 1, 1, 96>}, {transform_indices = @transform_3, window_bounds = array<i64: 1, 32, 32>}, {transform_indices = @transform_4, window_bounds = array<i64: 1, 1, 32>}, {transform_indices = @transform_5, window_bounds = array<i64: 1, 1, 32>}, {transform_indices = @transform_6, window_bounds = array<i64: 1, 1, 32>}, {transform_indices = @transform_7, window_bounds = array<i64: 1, 32, 128>}, {transform_indices = @transform_8, window_bounds = array<i64: 1, 1, 128>}, {transform_indices = @transform_9, window_bounds = array<i64: 1, 128, 32>}, {transform_indices = @transform_10, window_bounds = array<i64: 1, 1, 32>}, {transform_indices = @transform_11, window_bounds = array<i64: 1, 1, 32>}, {transform_indices = @transform_12, window_bounds = array<i64: 1, 1, 32>}, {pipeline_mode = #tpu.pipeline_mode<synchronous>, transform_indices = @transform_13, window_bounds = array<i64: 1, 32>}, {pipeline_mode = #tpu.pipeline_mode<synchronous>, transform_indices = @transform_14, window_bounds = array<i64: 1, 32>}, {transform_indices = @transform_15, window_bounds = array<i64: 1, 8, 32>}]} {
    %c0_i32 = arith.constant 0 : i32
    %0 = arith.cmpi eq, %arg1, %c0_i32 : i32
    %c0_i32_0 = arith.constant 0 : i32
    %1 = arith.cmpi eq, %arg2, %c0_i32_0 : i32
    %2 = arith.andi %0, %1 : i1
    %3 = arith.extui %2 : i1 to i32
    %c0_i32_1 = arith.constant 0 : i32
    %4 = arith.cmpi ne, %3, %c0_i32_1 : i32
    scf.if %4 {
      %c0_25 = arith.constant 0 : index
      %c0_26 = arith.constant 0 : index
      %c0_27 = arith.constant 0 : index
      %39 = vector.load %arg3[%c0_25, %c0_26, %c0_27] : memref<1x8x32xf32, #tpu.memory_space<vmem>>, vector<1x8x32xf32>
      %c0_28 = arith.constant 0 : index
      %c0_29 = arith.constant 0 : index
      %c0_30 = arith.constant 0 : index
      %40 = vector.load %arg18[%c0_28, %c0_29, %c0_30] : memref<1x8x32xf32, #tpu.memory_space<vmem>>, vector<1x8x32xf32>
      tpu.vector_store %arg18[%c0_28, %c0_29, %c0_30], %39 {strides = array<i32>} : memref<1x8x32xf32, #tpu.memory_space<vmem>>, vector<1x8x32xf32>,
    } else {
    }
    %c0_i32_2 = arith.constant 0 : i32
    %5 = arith.cmpi eq, %arg2, %c0_i32_2 : i32
    %6 = arith.extui %5 : i1 to i32
    %c0_i32_3 = arith.constant 0 : i32
    %7 = arith.cmpi ne, %6, %c0_i32_3 : i32
    scf.if %7 {
      %c0_25 = arith.constant 0 : index
      %c0_26 = arith.constant 0 : index
      %c0_27 = arith.constant 0 : index
      %39 = vector.load %arg18[%c0_25, %c0_26, %c0_27] : memref<1x8x32xf32, #tpu.memory_space<vmem>>, vector<1x8x32xf32>
      %40 = vector.shape_cast %39 : vector<1x8x32xf32> to vector<8x32xf32>
      %41 = arith.truncf %40 : vector<8x32xf32> to vector<8x32xbf16>
      %c0_28 = arith.constant 0 : index
      %c0_29 = arith.constant 0 : index
      %c0_30 = arith.constant 0 : index
      %42 = vector.load %arg4[%c0_28, %c0_29, %c0_30] : memref<1x32x96xbf16, #tpu.memory_space<vmem>>, vector<1x32x96xbf16>
      %43 = vector.shape_cast %42 : vector<1x32x96xbf16> to vector<32x96xbf16>
      %cst_31 = arith.constant dense<0.000000e+00> : vector<8x96xf32>
      %44 = tpu.matmul %41, %43, %cst_31 {dimension_numbers = #tpu.dot_dimension_numbers<[1], [0], [0], [1], [0, 0, 1, 1], [], []>} : vector<8x32xbf16>, vector<32x96xbf16>, vector<8x96xf32> -> vector<8x96xf32>
      %c0_32 = arith.constant 0 : index
      %c0_33 = arith.constant 0 : index
      %c0_34 = arith.constant 0 : index
      %45 = vector.load %arg5[%c0_32, %c0_33, %c0_34] : memref<1x1x96xf32, #tpu.memory_space<vmem>>, vector<1x1x96xf32>
      %46 = vector.shape_cast %45 : vector<1x1x96xf32> to vector<1x96xf32>
      %47 = vector.broadcast %46 : vector<1x96xf32> to vector<8x96xf32>
      %48 = arith.addf %44, %47 : vector<8x96xf32>
      %c0_35 = arith.constant 0 : index
      %c0_36 = arith.constant 0 : index
      %c0_37 = arith.constant 0 : index
      %49 = vector.load %arg6[%c0_35, %c0_36, %c0_37] : memref<1x32x32xbf16, #tpu.memory_space<vmem>>, vector<1x32x32xbf16>
      %50 = vector.shape_cast %49 : vector<1x32x32xbf16> to vector<32x32xbf16>
      %51 = vector.extract_strided_slice %48 {offsets = [0, 0], sizes = [8, 8], strides = [1, 1]} : vector<8x96xf32> to vector<8x8xf32>
      %52 = vector.extract_strided_slice %48 {offsets = [0, 32], sizes = [8, 8], strides = [1, 1]} : vector<8x96xf32> to vector<8x8xf32>
      %53 = vector.extract_strided_slice %48 {offsets = [0, 64], sizes = [8, 8], strides = [1, 1]} : vector<8x96xf32> to vector<8x8xf32>
      %54 = vector.shape_cast %51 : vector<8x8xf32> to vector<1x8x8xf32>
      %55 = arith.truncf %54 : vector<1x8x8xf32> to vector<1x8x8xbf16>
      %56 = vector.shape_cast %52 : vector<8x8xf32> to vector<1x8x8xf32>
      %57 = arith.truncf %56 : vector<1x8x8xf32> to vector<1x8x8xbf16>
      %58 = vector.shape_cast %53 : vector<8x8xf32> to vector<1x8x8xf32>
      %59 = arith.truncf %58 : vector<1x8x8xf32> to vector<1x8x8xbf16>
      "tpu.trace_start"() <{level = 10 : i32, message = "bqd,bkd->bqk"}> : () -> ()
      %cst_38 = arith.constant dense<0.000000e+00> : vector<1x8x8xf32>
      %60 = tpu.matmul %55, %57, %cst_38 {dimension_numbers = #tpu.dot_dimension_numbers<[2], [2], [1], [1], [0, 0, 0, 1, 1, 1], [0], [0]>} : vector<1x8x8xbf16>, vector<1x8x8xbf16>, vector<1x8x8xf32> -> vector<1x8x8xf32>
      "tpu.trace_stop"() : () -> ()
      %cst_39 = arith.constant 0.353553385 : f32
      %61 = vector.broadcast %cst_39 : f32 to vector<1x8x8xf32>
      %62 = arith.mulf %60, %61 : vector<1x8x8xf32>
      %cst_40 = arith.constant dense<0xFF800000> : vector<1x8xf32>
      %63 = vector.multi_reduction <maximumf>, %62, %cst_40 [2] : vector<1x8x8xf32> to vector<1x8xf32>
      %64 = vector.shape_cast %63 : vector<1x8xf32> to vector<1x8x1xf32>
      %65 = vector.broadcast %64 : vector<1x8x1xf32> to vector<1x8x8xf32>
      %66 = arith.subf %62, %65 : vector<1x8x8xf32>
      %67 = math.exp %66 : vector<1x8x8xf32>
      %cst_41 = arith.constant dense<0.000000e+00> : vector<1x8xf32>
      %68 = vector.multi_reduction <add>, %67, %cst_41 [2] : vector<1x8x8xf32> to vector<1x8xf32>
      %69 = vector.shape_cast %68 : vector<1x8xf32> to vector<1x8x1xf32>
      %70 = tpu.reciprocal %69 {approx = true} : vector<1x8x1xf32> -> vector<1x8x1xf32>
      %71 = vector.broadcast %70 : vector<1x8x1xf32> to vector<1x8x8xf32>
      %72 = arith.mulf %67, %71 : vector<1x8x8xf32>
      %73 = arith.truncf %72 : vector<1x8x8xf32> to vector<1x8x8xbf16>
      "tpu.trace_start"() <{level = 10 : i32, message = "bqk,bkd->bqd"}> : () -> ()
      %cst_42 = arith.constant dense<0.000000e+00> : vector<1x8x8xf32>
      %74 = tpu.matmul %73, %59, %cst_42 {dimension_numbers = #tpu.dot_dimension_numbers<[2], [1], [1], [2], [0, 0, 0, 1, 1, 2], [0], [0]>} : vector<1x8x8xbf16>, vector<1x8x8xbf16>, vector<1x8x8xf32> -> vector<1x8x8xf32>
      "tpu.trace_stop"() : () -> ()
      %75 = vector.shape_cast %74 : vector<1x8x8xf32> to vector<8x8xf32>
      %76 = arith.truncf %75 : vector<8x8xf32> to vector<8x8xbf16>
      %77 = vector.extract_strided_slice %50 {offsets = [0, 0], sizes = [8, 32], strides = [1, 1]} : vector<32x32xbf16> to vector<8x32xbf16>
      %cst_43 = arith.constant dense<0.000000e+00> : vector<8x32xf32>
      %78 = tpu.matmul %76, %77, %cst_43 {dimension_numbers = #tpu.dot_dimension_numbers<[1], [0], [0], [1], [0, 0, 1, 1], [], []>} : vector<8x8xbf16>, vector<8x32xbf16>, vector<8x32xf32> -> vector<8x32xf32>
      %79 = vector.extract_strided_slice %48 {offsets = [0, 8], sizes = [8, 8], strides = [1, 1]} : vector<8x96xf32> to vector<8x8xf32>
      %80 = vector.extract_strided_slice %48 {offsets = [0, 40], sizes = [8, 8], strides = [1, 1]} : vector<8x96xf32> to vector<8x8xf32>
      %81 = vector.extract_strided_slice %48 {offsets = [0, 72], sizes = [8, 8], strides = [1, 1]} : vector<8x96xf32> to vector<8x8xf32>
      %82 = vector.shape_cast %79 : vector<8x8xf32> to vector<1x8x8xf32>
      %83 = arith.truncf %82 : vector<1x8x8xf32> to vector<1x8x8xbf16>
      %84 = vector.shape_cast %80 : vector<8x8xf32> to vector<1x8x8xf32>
      %85 = arith.truncf %84 : vector<1x8x8xf32> to vector<1x8x8xbf16>
      %86 = vector.shape_cast %81 : vector<8x8xf32> to vector<1x8x8xf32>
      %87 = arith.truncf %86 : vector<1x8x8xf32> to vector<1x8x8xbf16>
      "tpu.trace_start"() <{level = 10 : i32, message = "bqd,bkd->bqk"}> : () -> ()
      %cst_44 = arith.constant dense<0.000000e+00> : vector<1x8x8xf32>
      %88 = tpu.matmul %83, %85, %cst_44 {dimension_numbers = #tpu.dot_dimension_numbers<[2], [2], [1], [1], [0, 0, 0, 1, 1, 1], [0], [0]>} : vector<1x8x8xbf16>, vector<1x8x8xbf16>, vector<1x8x8xf32> -> vector<1x8x8xf32>
      "tpu.trace_stop"() : () -> ()
      %cst_45 = arith.constant 0.353553385 : f32
      %89 = vector.broadcast %cst_45 : f32 to vector<1x8x8xf32>
      %90 = arith.mulf %88, %89 : vector<1x8x8xf32>
      %cst_46 = arith.constant dense<0xFF800000> : vector<1x8xf32>
      %91 = vector.multi_reduction <maximumf>, %90, %cst_46 [2] : vector<1x8x8xf32> to vector<1x8xf32>
      %92 = vector.shape_cast %91 : vector<1x8xf32> to vector<1x8x1xf32>
      %93 = vector.broadcast %92 : vector<1x8x1xf32> to vector<1x8x8xf32>
      %94 = arith.subf %90, %93 : vector<1x8x8xf32>
      %95 = math.exp %94 : vector<1x8x8xf32>
      %cst_47 = arith.constant dense<0.000000e+00> : vector<1x8xf32>
      %96 = vector.multi_reduction <add>, %95, %cst_47 [2] : vector<1x8x8xf32> to vector<1x8xf32>
      %97 = vector.shape_cast %96 : vector<1x8xf32> to vector<1x8x1xf32>
      %98 = tpu.reciprocal %97 {approx = true} : vector<1x8x1xf32> -> vector<1x8x1xf32>
      %99 = vector.broadcast %98 : vector<1x8x1xf32> to vector<1x8x8xf32>
      %100 = arith.mulf %95, %99 : vector<1x8x8xf32>
      %101 = arith.truncf %100 : vector<1x8x8xf32> to vector<1x8x8xbf16>
      "tpu.trace_start"() <{level = 10 : i32, message = "bqk,bkd->bqd"}> : () -> ()
      %cst_48 = arith.constant dense<0.000000e+00> : vector<1x8x8xf32>
      %102 = tpu.matmul %101, %87, %cst_48 {dimension_numbers = #tpu.dot_dimension_numbers<[2], [1], [1], [2], [0, 0, 0, 1, 1, 2], [0], [0]>} : vector<1x8x8xbf16>, vector<1x8x8xbf16>, vector<1x8x8xf32> -> vector<1x8x8xf32>
      "tpu.trace_stop"() : () -> ()
      %103 = vector.shape_cast %102 : vector<1x8x8xf32> to vector<8x8xf32>
      %104 = arith.truncf %103 : vector<8x8xf32> to vector<8x8xbf16>
      %105 = vector.extract_strided_slice %50 {offsets = [8, 0], sizes = [8, 32], strides = [1, 1]} : vector<32x32xbf16> to vector<8x32xbf16>
      %cst_49 = arith.constant dense<0.000000e+00> : vector<8x32xf32>
      %106 = tpu.matmul %104, %105, %cst_49 {dimension_numbers = #tpu.dot_dimension_numbers<[1], [0], [0], [1], [0, 0, 1, 1], [], []>} : vector<8x8xbf16>, vector<8x32xbf16>, vector<8x32xf32> -> vector<8x32xf32>
      %107 = arith.addf %78, %106 : vector<8x32xf32>
      %108 = vector.extract_strided_slice %48 {offsets = [0, 16], sizes = [8, 8], strides = [1, 1]} : vector<8x96xf32> to vector<8x8xf32>
      %109 = vector.extract_strided_slice %48 {offsets = [0, 48], sizes = [8, 8], strides = [1, 1]} : vector<8x96xf32> to vector<8x8xf32>
      %110 = vector.extract_strided_slice %48 {offsets = [0, 80], sizes = [8, 8], strides = [1, 1]} : vector<8x96xf32> to vector<8x8xf32>
      %111 = vector.shape_cast %108 : vector<8x8xf32> to vector<1x8x8xf32>
      %112 = arith.truncf %111 : vector<1x8x8xf32> to vector<1x8x8xbf16>
      %113 = vector.shape_cast %109 : vector<8x8xf32> to vector<1x8x8xf32>
      %114 = arith.truncf %113 : vector<1x8x8xf32> to vector<1x8x8xbf16>
      %115 = vector.shape_cast %110 : vector<8x8xf32> to vector<1x8x8xf32>
      %116 = arith.truncf %115 : vector<1x8x8xf32> to vector<1x8x8xbf16>
      "tpu.trace_start"() <{level = 10 : i32, message = "bqd,bkd->bqk"}> : () -> ()
      %cst_50 = arith.constant dense<0.000000e+00> : vector<1x8x8xf32>
      %117 = tpu.matmul %112, %114, %cst_50 {dimension_numbers = #tpu.dot_dimension_numbers<[2], [2], [1], [1], [0, 0, 0, 1, 1, 1], [0], [0]>} : vector<1x8x8xbf16>, vector<1x8x8xbf16>, vector<1x8x8xf32> -> vector<1x8x8xf32>
      "tpu.trace_stop"() : () -> ()
      %cst_51 = arith.constant 0.353553385 : f32
      %118 = vector.broadcast %cst_51 : f32 to vector<1x8x8xf32>
      %119 = arith.mulf %117, %118 : vector<1x8x8xf32>
      %cst_52 = arith.constant dense<0xFF800000> : vector<1x8xf32>
      %120 = vector.multi_reduction <maximumf>, %119, %cst_52 [2] : vector<1x8x8xf32> to vector<1x8xf32>
      %121 = vector.shape_cast %120 : vector<1x8xf32> to vector<1x8x1xf32>
      %122 = vector.broadcast %121 : vector<1x8x1xf32> to vector<1x8x8xf32>
      %123 = arith.subf %119, %122 : vector<1x8x8xf32>
      %124 = math.exp %123 : vector<1x8x8xf32>
      %cst_53 = arith.constant dense<0.000000e+00> : vector<1x8xf32>
      %125 = vector.multi_reduction <add>, %124, %cst_53 [2] : vector<1x8x8xf32> to vector<1x8xf32>
      %126 = vector.shape_cast %125 : vector<1x8xf32> to vector<1x8x1xf32>
      %127 = tpu.reciprocal %126 {approx = true} : vector<1x8x1xf32> -> vector<1x8x1xf32>
      %128 = vector.broadcast %127 : vector<1x8x1xf32> to vector<1x8x8xf32>
      %129 = arith.mulf %124, %128 : vector<1x8x8xf32>
      %130 = arith.truncf %129 : vector<1x8x8xf32> to vector<1x8x8xbf16>
      "tpu.trace_start"() <{level = 10 : i32, message = "bqk,bkd->bqd"}> : () -> ()
      %cst_54 = arith.constant dense<0.000000e+00> : vector<1x8x8xf32>
      %131 = tpu.matmul %130, %116, %cst_54 {dimension_numbers = #tpu.dot_dimension_numbers<[2], [1], [1], [2], [0, 0, 0, 1, 1, 2], [0], [0]>} : vector<1x8x8xbf16>, vector<1x8x8xbf16>, vector<1x8x8xf32> -> vector<1x8x8xf32>
      "tpu.trace_stop"() : () -> ()
      %132 = vector.shape_cast %131 : vector<1x8x8xf32> to vector<8x8xf32>
      %133 = arith.truncf %132 : vector<8x8xf32> to vector<8x8xbf16>
      %134 = vector.extract_strided_slice %50 {offsets = [16, 0], sizes = [8, 32], strides = [1, 1]} : vector<32x32xbf16> to vector<8x32xbf16>
      %cst_55 = arith.constant dense<0.000000e+00> : vector<8x32xf32>
      %135 = tpu.matmul %133, %134, %cst_55 {dimension_numbers = #tpu.dot_dimension_numbers<[1], [0], [0], [1], [0, 0, 1, 1], [], []>} : vector<8x8xbf16>, vector<8x32xbf16>, vector<8x32xf32> -> vector<8x32xf32>
      %136 = arith.addf %107, %135 : vector<8x32xf32>
      %137 = vector.extract_strided_slice %48 {offsets = [0, 24], sizes = [8, 8], strides = [1, 1]} : vector<8x96xf32> to vector<8x8xf32>
      %138 = vector.extract_strided_slice %48 {offsets = [0, 56], sizes = [8, 8], strides = [1, 1]} : vector<8x96xf32> to vector<8x8xf32>
      %139 = vector.extract_strided_slice %48 {offsets = [0, 88], sizes = [8, 8], strides = [1, 1]} : vector<8x96xf32> to vector<8x8xf32>
      %140 = vector.shape_cast %137 : vector<8x8xf32> to vector<1x8x8xf32>
      %141 = arith.truncf %140 : vector<1x8x8xf32> to vector<1x8x8xbf16>
      %142 = vector.shape_cast %138 : vector<8x8xf32> to vector<1x8x8xf32>
      %143 = arith.truncf %142 : vector<1x8x8xf32> to vector<1x8x8xbf16>
      %144 = vector.shape_cast %139 : vector<8x8xf32> to vector<1x8x8xf32>
      %145 = arith.truncf %144 : vector<1x8x8xf32> to vector<1x8x8xbf16>
      "tpu.trace_start"() <{level = 10 : i32, message = "bqd,bkd->bqk"}> : () -> ()
      %cst_56 = arith.constant dense<0.000000e+00> : vector<1x8x8xf32>
      %146 = tpu.matmul %141, %143, %cst_56 {dimension_numbers = #tpu.dot_dimension_numbers<[2], [2], [1], [1], [0, 0, 0, 1, 1, 1], [0], [0]>} : vector<1x8x8xbf16>, vector<1x8x8xbf16>, vector<1x8x8xf32> -> vector<1x8x8xf32>
      "tpu.trace_stop"() : () -> ()
      %cst_57 = arith.constant 0.353553385 : f32
      %147 = vector.broadcast %cst_57 : f32 to vector<1x8x8xf32>
      %148 = arith.mulf %146, %147 : vector<1x8x8xf32>
      %cst_58 = arith.constant dense<0xFF800000> : vector<1x8xf32>
      %149 = vector.multi_reduction <maximumf>, %148, %cst_58 [2] : vector<1x8x8xf32> to vector<1x8xf32>
      %150 = vector.shape_cast %149 : vector<1x8xf32> to vector<1x8x1xf32>
      %151 = vector.broadcast %150 : vector<1x8x1xf32> to vector<1x8x8xf32>
      %152 = arith.subf %148, %151 : vector<1x8x8xf32>
      %153 = math.exp %152 : vector<1x8x8xf32>
      %cst_59 = arith.constant dense<0.000000e+00> : vector<1x8xf32>
      %154 = vector.multi_reduction <add>, %153, %cst_59 [2] : vector<1x8x8xf32> to vector<1x8xf32>
      %155 = vector.shape_cast %154 : vector<1x8xf32> to vector<1x8x1xf32>
      %156 = tpu.reciprocal %155 {approx = true} : vector<1x8x1xf32> -> vector<1x8x1xf32>
      %157 = vector.broadcast %156 : vector<1x8x1xf32> to vector<1x8x8xf32>
      %158 = arith.mulf %153, %157 : vector<1x8x8xf32>
      %159 = arith.truncf %158 : vector<1x8x8xf32> to vector<1x8x8xbf16>
      "tpu.trace_start"() <{level = 10 : i32, message = "bqk,bkd->bqd"}> : () -> ()
      %cst_60 = arith.constant dense<0.000000e+00> : vector<1x8x8xf32>
      %160 = tpu.matmul %159, %145, %cst_60 {dimension_numbers = #tpu.dot_dimension_numbers<[2], [1], [1], [2], [0, 0, 0, 1, 1, 2], [0], [0]>} : vector<1x8x8xbf16>, vector<1x8x8xbf16>, vector<1x8x8xf32> -> vector<1x8x8xf32>
      "tpu.trace_stop"() : () -> ()
      %161 = vector.shape_cast %160 : vector<1x8x8xf32> to vector<8x8xf32>
      %162 = arith.truncf %161 : vector<8x8xf32> to vector<8x8xbf16>
      %163 = vector.extract_strided_slice %50 {offsets = [24, 0], sizes = [8, 32], strides = [1, 1]} : vector<32x32xbf16> to vector<8x32xbf16>
      %cst_61 = arith.constant dense<0.000000e+00> : vector<8x32xf32>
      %164 = tpu.matmul %162, %163, %cst_61 {dimension_numbers = #tpu.dot_dimension_numbers<[1], [0], [0], [1], [0, 0, 1, 1], [], []>} : vector<8x8xbf16>, vector<8x32xbf16>, vector<8x32xf32> -> vector<8x32xf32>
      %165 = arith.addf %136, %164 : vector<8x32xf32>
      %c0_62 = arith.constant 0 : index
      %c0_63 = arith.constant 0 : index
      %c0_64 = arith.constant 0 : index
      %166 = vector.load %arg7[%c0_62, %c0_63, %c0_64] : memref<1x1x32xf32, #tpu.memory_space<vmem>>, vector<1x1x32xf32>
      %167 = vector.shape_cast %166 : vector<1x1x32xf32> to vector<1x32xf32>
      %168 = vector.broadcast %167 : vector<1x32xf32> to vector<8x32xf32>
      %169 = arith.addf %165, %168 : vector<8x32xf32>
      %170 = arith.addf %169, %40 : vector<8x32xf32>
      %c0_65 = arith.constant 0 : index
      %c0_66 = arith.constant 0 : index
      %c0_67 = arith.constant 0 : index
      %171 = vector.load %arg8[%c0_65, %c0_66, %c0_67] : memref<1x1x32xf32, #tpu.memory_space<vmem>>, vector<1x1x32xf32>
      %172 = vector.shape_cast %171 : vector<1x1x32xf32> to vector<1x32xf32>
      %c0_68 = arith.constant 0 : index
      %c0_69 = arith.constant 0 : index
      %c0_70 = arith.constant 0 : index
      %173 = vector.load %arg9[%c0_68, %c0_69, %c0_70] : memref<1x1x32xf32, #tpu.memory_space<vmem>>, vector<1x1x32xf32>
      %174 = vector.shape_cast %173 : vector<1x1x32xf32> to vector<1x32xf32>
      %cst_71 = arith.constant dense<0.000000e+00> : vector<8xf32>
      %175 = vector.multi_reduction <add>, %170, %cst_71 [1] : vector<8x32xf32> to vector<8xf32>
      %176 = vector.shape_cast %175 : vector<8xf32> to vector<8x1xf32>
      %cst_72 = arith.constant 3.200000e+01 : f32
      %177 = vector.broadcast %cst_72 : f32 to vector<8x1xf32>
      %178 = arith.divf %176, %177 : vector<8x1xf32>
      %179 = vector.broadcast %178 : vector<8x1xf32> to vector<8x32xf32>
      %180 = arith.subf %170, %179 : vector<8x32xf32>
      %181 = arith.mulf %180, %180 : vector<8x32xf32>
      %cst_73 = arith.constant dense<0.000000e+00> : vector<8xf32>
      %182 = vector.multi_reduction <add>, %181, %cst_73 [1] : vector<8x32xf32> to vector<8xf32>
      %183 = vector.shape_cast %182 : vector<8xf32> to vector<8x1xf32>
      %cst_74 = arith.constant 3.200000e+01 : f32
      %184 = vector.broadcast %cst_74 : f32 to vector<8x1xf32>
      %185 = arith.divf %183, %184 : vector<8x1xf32>
      %186 = vector.broadcast %178 : vector<8x1xf32> to vector<8x32xf32>
      %187 = arith.subf %170, %186 : vector<8x32xf32>
      %cst_75 = arith.constant 9.99999974E-6 : f32
      %188 = vector.broadcast %cst_75 : f32 to vector<8x1xf32>
      %189 = arith.addf %185, %188 : vector<8x1xf32>
      %190 = math.rsqrt %189 : vector<8x1xf32>
      %191 = vector.broadcast %190 : vector<8x1xf32> to vector<8x32xf32>
      %192 = arith.mulf %187, %191 : vector<8x32xf32>
      %193 = vector.broadcast %172 : vector<1x32xf32> to vector<8x32xf32>
      %194 = arith.mulf %192, %193 : vector<8x32xf32>
      %195 = vector.broadcast %174 : vector<1x32xf32> to vector<8x32xf32>
      %196 = arith.addf %194, %195 : vector<8x32xf32>
      %c0_76 = arith.constant 0 : index
      %c0_77 = arith.constant 0 : index
      %197 = vector.load %arg19[%c0_76, %c0_77] : memref<8x32xf32, #tpu.memory_space<vmem>>, vector<8x32xf32>
      tpu.vector_store %arg19[%c0_76, %c0_77], %196 {strides = array<i32>} : memref<8x32xf32, #tpu.memory_space<vmem>>, vector<8x32xf32>,
    } else {
    }
    %c0 = arith.constant 0 : index
    %c0_4 = arith.constant 0 : index
    %8 = vector.load %arg19[%c0, %c0_4] : memref<8x32xf32, #tpu.memory_space<vmem>>, vector<8x32xf32>
    %9 = arith.truncf %8 : vector<8x32xf32> to vector<8x32xbf16>
    %c0_5 = arith.constant 0 : index
    %c0_6 = arith.constant 0 : index
    %c0_7 = arith.constant 0 : index
    %10 = vector.load %arg10[%c0_5, %c0_6, %c0_7] : memref<1x32x128xbf16, #tpu.memory_space<vmem>>, vector<1x32x128xbf16>
    %11 = vector.shape_cast %10 : vector<1x32x128xbf16> to vector<32x128xbf16>
    %cst = arith.constant dense<0.000000e+00> : vector<8x128xf32>
    %12 = tpu.matmul %9, %11, %cst {dimension_numbers = #tpu.dot_dimension_numbers<[1], [0], [0], [1], [0, 0, 1, 1], [], []>} : vector<8x32xbf16>, vector<32x128xbf16>, vector<8x128xf32> -> vector<8x128xf32>
    %c0_8 = arith.constant 0 : index
    %c0_9 = arith.constant 0 : index
    %c0_10 = arith.constant 0 : index
    %13 = vector.load %arg11[%c0_8, %c0_9, %c0_10] : memref<1x1x128xf32, #tpu.memory_space<vmem>>, vector<1x1x128xf32>
    %14 = vector.shape_cast %13 : vector<1x1x128xf32> to vector<1x128xf32>
    %15 = vector.broadcast %14 : vector<1x128xf32> to vector<8x128xf32>
    %16 = arith.addf %12, %15 : vector<8x128xf32>
    %cst_11 = arith.constant 0.000000e+00 : f32
    %17 = vector.broadcast %cst_11 : f32 to vector<8x128xf32>
    %18 = arith.maximumf %16, %17 : vector<8x128xf32>
    %19 = arith.truncf %18 : vector<8x128xf32> to vector<8x128xbf16>
    %c0_12 = arith.constant 0 : index
    %c0_13 = arith.constant 0 : index
    %c0_14 = arith.constant 0 : index
    %20 = vector.load %arg12[%c0_12, %c0_13, %c0_14] : memref<1x128x32xbf16, #tpu.memory_space<vmem>>, vector<1x128x32xbf16>
    %21 = vector.shape_cast %20 : vector<1x128x32xbf16> to vector<128x32xbf16>
    %cst_15 = arith.constant dense<0.000000e+00> : vector<8x32xf32>
    %22 = tpu.matmul %19, %21, %cst_15 {dimension_numbers = #tpu.dot_dimension_numbers<[1], [0], [0], [1], [0, 0, 1, 1], [], []>} : vector<8x128xbf16>, vector<128x32xbf16>, vector<8x32xf32> -> vector<8x32xf32>
    %c0_i32_16 = arith.constant 0 : i32
    %23 = arith.cmpi eq, %arg2, %c0_i32_16 : i32
    %24 = arith.extui %23 : i1 to i32
    %c0_i32_17 = arith.constant 0 : i32
    %25 = arith.cmpi ne, %24, %c0_i32_17 : i32
    scf.if %25 {
      %c0_25 = arith.constant 0 : index
      %c0_26 = arith.constant 0 : index
      %39 = vector.load %arg20[%c0_25, %c0_26] : memref<8x32xf32, #tpu.memory_space<vmem>>, vector<8x32xf32>
      tpu.vector_store %arg20[%c0_25, %c0_26], %22 {strides = array<i32>} : memref<8x32xf32, #tpu.memory_space<vmem>>, vector<8x32xf32>,
    } else {
    }
    %c0_i32_18 = arith.constant 0 : i32
    %26 = arith.cmpi sgt, %arg2, %c0_i32_18 : i32
    %27 = arith.extui %26 : i1 to i32
    %c0_i32_19 = arith.constant 0 : i32
    %28 = arith.cmpi ne, %27, %c0_i32_19 : i32
    scf.if %28 {
      %c0_25 = arith.constant 0 : index
      %c0_26 = arith.constant 0 : index
      %39 = vector.load %arg20[%c0_25, %c0_26] : memref<8x32xf32, #tpu.memory_space<vmem>>, vector<8x32xf32>
      %40 = arith.addf %39, %22 : vector<8x32xf32>
      %c0_27 = arith.constant 0 : index
      %c0_28 = arith.constant 0 : index
      %41 = vector.load %arg20[%c0_27, %c0_28] : memref<8x32xf32, #tpu.memory_space<vmem>>, vector<8x32xf32>
      tpu.vector_store %arg20[%c0_27, %c0_28], %40 {strides = array<i32>} : memref<8x32xf32, #tpu.memory_space<vmem>>, vector<8x32xf32>,
    } else {
    }
    %c1_i32 = arith.constant 1 : i32
    %29 = arith.cmpi eq, %arg2, %c1_i32 : i32
    %c1_i32_20 = arith.constant 1 : i32
    %30 = arith.cmpi slt, %arg1, %c1_i32_20 : i32
    %31 = arith.andi %29, %30 : i1
    %32 = arith.extui %31 : i1 to i32
    %c0_i32_21 = arith.constant 0 : i32
    %33 = arith.cmpi ne, %32, %c0_i32_21 : i32
    scf.if %33 {
      %c0_25 = arith.constant 0 : index
      %c0_26 = arith.constant 0 : index
      %39 = vector.load %arg20[%c0_25, %c0_26] : memref<8x32xf32, #tpu.memory_space<vmem>>, vector<8x32xf32>
      %c0_27 = arith.constant 0 : index
      %c0_28 = arith.constant 0 : index
      %c0_29 = arith.constant 0 : index
      %40 = vector.load %arg13[%c0_27, %c0_28, %c0_29] : memref<1x1x32xf32, #tpu.memory_space<vmem>>, vector<1x1x32xf32>
      %41 = vector.shape_cast %40 : vector<1x1x32xf32> to vector<1x32xf32>
      %42 = vector.broadcast %41 : vector<1x32xf32> to vector<8x32xf32>
      %43 = arith.addf %39, %42 : vector<8x32xf32>
      %c0_30 = arith.constant 0 : index
      %c0_31 = arith.constant 0 : index
      %44 = vector.load %arg19[%c0_30, %c0_31] : memref<8x32xf32, #tpu.memory_space<vmem>>, vector<8x32xf32>
      %45 = arith.addf %43, %44 : vector<8x32xf32>
      %c0_32 = arith.constant 0 : index
      %c0_33 = arith.constant 0 : index
      %c0_34 = arith.constant 0 : index
      %46 = vector.load %arg14[%c0_32, %c0_33, %c0_34] : memref<1x1x32xf32, #tpu.memory_space<vmem>>, vector<1x1x32xf32>
      %47 = vector.shape_cast %46 : vector<1x1x32xf32> to vector<1x32xf32>
      %c0_35 = arith.constant 0 : index
      %c0_36 = arith.constant 0 : index
      %c0_37 = arith.constant 0 : index
      %48 = vector.load %arg15[%c0_35, %c0_36, %c0_37] : memref<1x1x32xf32, #tpu.memory_space<vmem>>, vector<1x1x32xf32>
      %49 = vector.shape_cast %48 : vector<1x1x32xf32> to vector<1x32xf32>
      %cst_38 = arith.constant dense<0.000000e+00> : vector<8xf32>
      %50 = vector.multi_reduction <add>, %45, %cst_38 [1] : vector<8x32xf32> to vector<8xf32>
      %51 = vector.shape_cast %50 : vector<8xf32> to vector<8x1xf32>
      %cst_39 = arith.constant 3.200000e+01 : f32
      %52 = vector.broadcast %cst_39 : f32 to vector<8x1xf32>
      %53 = arith.divf %51, %52 : vector<8x1xf32>
      %54 = vector.broadcast %53 : vector<8x1xf32> to vector<8x32xf32>
      %55 = arith.subf %45, %54 : vector<8x32xf32>
      %56 = arith.mulf %55, %55 : vector<8x32xf32>
      %cst_40 = arith.constant dense<0.000000e+00> : vector<8xf32>
      %57 = vector.multi_reduction <add>, %56, %cst_40 [1] : vector<8x32xf32> to vector<8xf32>
      %58 = vector.shape_cast %57 : vector<8xf32> to vector<8x1xf32>
      %cst_41 = arith.constant 3.200000e+01 : f32
      %59 = vector.broadcast %cst_41 : f32 to vector<8x1xf32>
      %60 = arith.divf %58, %59 : vector<8x1xf32>
      %61 = vector.broadcast %53 : vector<8x1xf32> to vector<8x32xf32>
      %62 = arith.subf %45, %61 : vector<8x32xf32>
      %cst_42 = arith.constant 9.99999974E-6 : f32
      %63 = vector.broadcast %cst_42 : f32 to vector<8x1xf32>
      %64 = arith.addf %60, %63 : vector<8x1xf32>
      %65 = math.rsqrt %64 : vector<8x1xf32>
      %66 = vector.broadcast %65 : vector<8x1xf32> to vector<8x32xf32>
      %67 = arith.mulf %62, %66 : vector<8x32xf32>
      %68 = vector.broadcast %47 : vector<1x32xf32> to vector<8x32xf32>
      %69 = arith.mulf %67, %68 : vector<8x32xf32>
      %70 = vector.broadcast %49 : vector<1x32xf32> to vector<8x32xf32>
      %71 = arith.addf %69, %70 : vector<8x32xf32>
      %72 = vector.shape_cast %71 : vector<8x32xf32> to vector<1x8x32xf32>
      %c0_43 = arith.constant 0 : index
      %c0_44 = arith.constant 0 : index
      %c0_45 = arith.constant 0 : index
      %73 = vector.load %arg18[%c0_43, %c0_44, %c0_45] : memref<1x8x32xf32, #tpu.memory_space<vmem>>, vector<1x8x32xf32>
      tpu.vector_store %arg18[%c0_43, %c0_44, %c0_45], %72 {strides = array<i32>} : memref<1x8x32xf32, #tpu.memory_space<vmem>>, vector<1x8x32xf32>,
    } else {
    }
    %c1_i32_22 = arith.constant 1 : i32
    %34 = arith.cmpi eq, %arg2, %c1_i32_22 : i32
    %c1_i32_23 = arith.constant 1 : i32
    %35 = arith.cmpi eq, %arg1, %c1_i32_23 : i32
    %36 = arith.andi %34, %35 : i1
    %37 = arith.extui %36 : i1 to i32
    %c0_i32_24 = arith.constant 0 : i32
    %38 = arith.cmpi ne, %37, %c0_i32_24 : i32
    scf.if %38 {
      %c0_25 = arith.constant 0 : index
      %c0_26 = arith.constant 0 : index
      %39 = vector.load %arg20[%c0_25, %c0_26] : memref<8x32xf32, #tpu.memory_space<vmem>>, vector<8x32xf32>
      %c0_27 = arith.constant 0 : index
      %c0_28 = arith.constant 0 : index
      %c0_29 = arith.constant 0 : index
      %40 = vector.load %arg13[%c0_27, %c0_28, %c0_29] : memref<1x1x32xf32, #tpu.memory_space<vmem>>, vector<1x1x32xf32>
      %41 = vector.shape_cast %40 : vector<1x1x32xf32> to vector<1x32xf32>
      %42 = vector.broadcast %41 : vector<1x32xf32> to vector<8x32xf32>
      %43 = arith.addf %39, %42 : vector<8x32xf32>
      %c0_30 = arith.constant 0 : index
      %c0_31 = arith.constant 0 : index
      %44 = vector.load %arg19[%c0_30, %c0_31] : memref<8x32xf32, #tpu.memory_space<vmem>>, vector<8x32xf32>
      %45 = arith.addf %43, %44 : vector<8x32xf32>
      %c0_32 = arith.constant 0 : index
      %c0_33 = arith.constant 0 : index
      %c0_34 = arith.constant 0 : index
      %46 = vector.load %arg14[%c0_32, %c0_33, %c0_34] : memref<1x1x32xf32, #tpu.memory_space<vmem>>, vector<1x1x32xf32>
      %47 = vector.shape_cast %46 : vector<1x1x32xf32> to vector<1x32xf32>
      %c0_35 = arith.constant 0 : index
      %c0_36 = arith.constant 0 : index
      %c0_37 = arith.constant 0 : index
      %48 = vector.load %arg15[%c0_35, %c0_36, %c0_37] : memref<1x1x32xf32, #tpu.memory_space<vmem>>, vector<1x1x32xf32>
      %49 = vector.shape_cast %48 : vector<1x1x32xf32> to vector<1x32xf32>
      %cst_38 = arith.constant dense<0.000000e+00> : vector<8xf32>
      %50 = vector.multi_reduction <add>, %45, %cst_38 [1] : vector<8x32xf32> to vector<8xf32>
      %51 = vector.shape_cast %50 : vector<8xf32> to vector<8x1xf32>
      %cst_39 = arith.constant 3.200000e+01 : f32
      %52 = vector.broadcast %cst_39 : f32 to vector<8x1xf32>
      %53 = arith.divf %51, %52 : vector<8x1xf32>
      %54 = vector.broadcast %53 : vector<8x1xf32> to vector<8x32xf32>
      %55 = arith.subf %45, %54 : vector<8x32xf32>
      %56 = arith.mulf %55, %55 : vector<8x32xf32>
      %cst_40 = arith.constant dense<0.000000e+00> : vector<8xf32>
      %57 = vector.multi_reduction <add>, %56, %cst_40 [1] : vector<8x32xf32> to vector<8xf32>
      %58 = vector.shape_cast %57 : vector<8xf32> to vector<8x1xf32>
      %cst_41 = arith.constant 3.200000e+01 : f32
      %59 = vector.broadcast %cst_41 : f32 to vector<8x1xf32>
      %60 = arith.divf %58, %59 : vector<8x1xf32>
      %61 = vector.broadcast %53 : vector<8x1xf32> to vector<8x32xf32>
      %62 = arith.subf %45, %61 : vector<8x32xf32>
      %cst_42 = arith.constant 9.99999974E-6 : f32
      %63 = vector.broadcast %cst_42 : f32 to vector<8x1xf32>
      %64 = arith.addf %60, %63 : vector<8x1xf32>
      %65 = math.rsqrt %64 : vector<8x1xf32>
      %66 = vector.broadcast %65 : vector<8x1xf32> to vector<8x32xf32>
      %67 = arith.mulf %62, %66 : vector<8x32xf32>
      %68 = vector.broadcast %47 : vector<1x32xf32> to vector<8x32xf32>
      %69 = arith.mulf %67, %68 : vector<8x32xf32>
      %70 = vector.broadcast %49 : vector<1x32xf32> to vector<8x32xf32>
      %71 = arith.addf %69, %70 : vector<8x32xf32>
      %c0_43 = arith.constant 0 : index
      %c0_44 = arith.constant 0 : index
      %72 = vector.load %arg16[%c0_43, %c0_44] : memref<1x32xf32, #tpu.memory_space<vmem>>, vector<1x32xf32>
      %c0_45 = arith.constant 0 : index
      %c0_46 = arith.constant 0 : index
      %73 = vector.load %arg17[%c0_45, %c0_46] : memref<1x32xf32, #tpu.memory_space<vmem>>, vector<1x32xf32>
      %cst_47 = arith.constant dense<0.000000e+00> : vector<8xf32>
      %74 = vector.multi_reduction <add>, %71, %cst_47 [1] : vector<8x32xf32> to vector<8xf32>
      %75 = vector.shape_cast %74 : vector<8xf32> to vector<8x1xf32>
      %cst_48 = arith.constant 3.200000e+01 : f32
      %76 = vector.broadcast %cst_48 : f32 to vector<8x1xf32>
      %77 = arith.divf %75, %76 : vector<8x1xf32>
      %78 = vector.broadcast %77 : vector<8x1xf32> to vector<8x32xf32>
      %79 = arith.subf %71, %78 : vector<8x32xf32>
      %80 = arith.mulf %79, %79 : vector<8x32xf32>
      %cst_49 = arith.constant dense<0.000000e+00> : vector<8xf32>
      %81 = vector.multi_reduction <add>, %80, %cst_49 [1] : vector<8x32xf32> to vector<8xf32>
      %82 = vector.shape_cast %81 : vector<8xf32> to vector<8x1xf32>
      %cst_50 = arith.constant 3.200000e+01 : f32
      %83 = vector.broadcast %cst_50 : f32 to vector<8x1xf32>
      %84 = arith.divf %82, %83 : vector<8x1xf32>
      %85 = vector.broadcast %77 : vector<8x1xf32> to vector<8x32xf32>
      %86 = arith.subf %71, %85 : vector<8x32xf32>
      %cst_51 = arith.constant 9.99999974E-6 : f32
      %87 = vector.broadcast %cst_51 : f32 to vector<8x1xf32>
      %88 = arith.addf %84, %87 : vector<8x1xf32>
      %89 = math.rsqrt %88 : vector<8x1xf32>
      %90 = vector.broadcast %89 : vector<8x1xf32> to vector<8x32xf32>
      %91 = arith.mulf %86, %90 : vector<8x32xf32>
      %92 = vector.broadcast %72 : vector<1x32xf32> to vector<8x32xf32>
      %93 = arith.mulf %91, %92 : vector<8x32xf32>
      %94 = vector.broadcast %73 : vector<1x32xf32> to vector<8x32xf32>
      %95 = arith.addf %93, %94 : vector<8x32xf32>
      %96 = vector.shape_cast %95 : vector<8x32xf32> to vector<1x8x32xf32>
      %c0_52 = arith.constant 0 : index
      %c0_53 = arith.constant 0 : index
      %c0_54 = arith.constant 0 : index
      %97 = vector.load %arg18[%c0_52, %c0_53, %c0_54] : memref<1x8x32xf32, #tpu.memory_space<vmem>>, vector<1x8x32xf32>
      tpu.vector_store %arg18[%c0_52, %c0_53, %c0_54], %96 {strides = array<i32>} : memref<1x8x32xf32, #tpu.memory_space<vmem>>, vector<1x8x32xf32>,
    } else {
    }
    return
  }
  func.func @transform_0(%arg0: i32, %arg1: i32, %arg2: i32) -> (i32, i32, i32) {
    %c0_i32 = arith.constant 0 : i32
    %c0_i32_0 = arith.constant 0 : i32
    %c0_i32_1 = arith.constant 0 : i32
    return %arg0, %c0_i32, %c0_i32_0 : i32, i32, i32
  }
  func.func @transform_1(%arg0: i32, %arg1: i32, %arg2: i32) -> (i32, i32, i32) {
    %c0_i32 = arith.constant 0 : i32
    %c0_i32_0 = arith.constant 0 : i32
    %c0_i32_1 = arith.constant 0 : i32
    return %arg1, %c0_i32, %c0_i32_0 : i32, i32, i32
  }
  func.func @transform_2(%arg0: i32, %arg1: i32, %arg2: i32) -> (i32, i32, i32) {
    %c0_i32 = arith.constant 0 : i32
    %c0_i32_0 = arith.constant 0 : i32
    %c0_i32_1 = arith.constant 0 : i32
    return %arg1, %c0_i32, %c0_i32_0 : i32, i32, i32
  }
  func.func @transform_3(%arg0: i32, %arg1: i32, %arg2: i32) -> (i32, i32, i32) {
    %c0_i32 = arith.constant 0 : i32
    %c0_i32_0 = arith.constant 0 : i32
    %c0_i32_1 = arith.constant 0 : i32
    return %arg1, %c0_i32, %c0_i32_0 : i32, i32, i32
  }
  func.func @transform_4(%arg0: i32, %arg1: i32, %arg2: i32) -> (i32, i32, i32) {
    %c0_i32 = arith.constant 0 : i32
    %c0_i32_0 = arith.constant 0 : i32
    %c0_i32_1 = arith.constant 0 : i32
    return %arg1, %c0_i32, %c0_i32_0 : i32, i32, i32
  }
  func.func @transform_5(%arg0: i32, %arg1: i32, %arg2: i32) -> (i32, i32, i32) {
    %c0_i32 = arith.constant 0 : i32
    %c0_i32_0 = arith.constant 0 : i32
    %c0_i32_1 = arith.constant 0 : i32
    return %arg1, %c0_i32, %c0_i32_0 : i32, i32, i32
  }
  func.func @transform_6(%arg0: i32, %arg1: i32, %arg2: i32) -> (i32, i32, i32) {
    %c0_i32 = arith.constant 0 : i32
    %c0_i32_0 = arith.constant 0 : i32
    %c0_i32_1 = arith.constant 0 : i32
    return %arg1, %c0_i32, %c0_i32_0 : i32, i32, i32
  }
  func.func @transform_7(%arg0: i32, %arg1: i32, %arg2: i32) -> (i32, i32, i32) {
    %c0_i32 = arith.constant 0 : i32
    %c0_i32_0 = arith.constant 0 : i32
    return %arg1, %c0_i32, %arg2 : i32, i32, i32
  }
  func.func @transform_8(%arg0: i32, %arg1: i32, %arg2: i32) -> (i32, i32, i32) {
    %c0_i32 = arith.constant 0 : i32
    %c0_i32_0 = arith.constant 0 : i32
    return %arg1, %c0_i32, %arg2 : i32, i32, i32
  }
  func.func @transform_9(%arg0: i32, %arg1: i32, %arg2: i32) -> (i32, i32, i32) {
    %c0_i32 = arith.constant 0 : i32
    %c0_i32_0 = arith.constant 0 : i32
    return %arg1, %arg2, %c0_i32 : i32, i32, i32
  }
  func.func @transform_10(%arg0: i32, %arg1: i32, %arg2: i32) -> (i32, i32, i32) {
    %c0_i32 = arith.constant 0 : i32
    %c0_i32_0 = arith.constant 0 : i32
    %c0_i32_1 = arith.constant 0 : i32
    return %arg1, %c0_i32, %c0_i32_0 : i32, i32, i32
  }
  func.func @transform_11(%arg0: i32, %arg1: i32, %arg2: i32) -> (i32, i32, i32) {
    %c0_i32 = arith.constant 0 : i32
    %c0_i32_0 = arith.constant 0 : i32
    %c0_i32_1 = arith.constant 0 : i32
    return %arg1, %c0_i32, %c0_i32_0 : i32, i32, i32
  }
  func.func @transform_12(%arg0: i32, %arg1: i32, %arg2: i32) -> (i32, i32, i32) {
    %c0_i32 = arith.constant 0 : i32
    %c0_i32_0 = arith.constant 0 : i32
    %c0_i32_1 = arith.constant 0 : i32
    return %arg1, %c0_i32, %c0_i32_0 : i32, i32, i32
  }
  func.func @transform_13(%arg0: i32, %arg1: i32, %arg2: i32) -> (i32, i32) {
    %c0_i32 = arith.constant 0 : i32
    %c0_i32_0 = arith.constant 0 : i32
    %c0_i32_1 = arith.constant 0 : i32
    return %c0_i32, %c0_i32_0 : i32, i32
  }
  func.func @transform_14(%arg0: i32, %arg1: i32, %arg2: i32) -> (i32, i32) {
    %c0_i32 = arith.constant 0 : i32
    %c0_i32_0 = arith.constant 0 : i32
    %c0_i32_1 = arith.constant 0 : i32
    return %c0_i32, %c0_i32_0 : i32, i32
  }
  func.func @transform_15(%arg0: i32, %arg1: i32, %arg2: i32) -> (i32, i32, i32) {
    %c0_i32 = arith.constant 0 : i32
    %c0_i32_0 = arith.constant 0 : i32
    %c0_i32_1 = arith.constant 0 : i32
    return %arg0, %c0_i32, %c0_i32_0 : i32, i32, i32
  }
}

</mosaic_0001>

<llo_original>
// kernel: tpu_custom_call.1
$region0: #{tpu_custom_call.1}
  #allocation0 [shape = 'u32[]', space=smem, size = 0x4, offset = 0x4, fixed_abs, tag = 'smem constant byte address 0x4 - core index']
  #allocation1 [shape = 'u32[144,128]{1,0:T(1,128)}', space=vmem, size = 0x12000, scoped, tag = 'internal scratch']
  #allocation2 [shape = 'f32[8,32]{1,0:T(8,128)}', space=vmem, size = 0x1000, scoped, tag = 'scratch operand']
  #allocation3 [shape = 'f32[8,32]{1,0:T(8,128)}', space=vmem, size = 0x1000, scoped, tag = 'scratch operand']
  %s0 = inlined_call_operand.vmem [shape: f32[2,8,32], index: 0, kind: input, shape index: {}]
  %s1 = inlined_call_operand.vmem [shape: bf16[2,32,96], index: 1, kind: input, shape index: {}]
  %s2 = inlined_call_operand.vmem [shape: f32[2,1,96], index: 2, kind: input, shape index: {}]
  %s3 = inlined_call_operand.vmem [shape: bf16[2,32,32], index: 3, kind: input, shape index: {}]
  %s4 = inlined_call_operand.vmem [shape: f32[2,1,32], index: 4, kind: input, shape index: {}]
  %s5 = inlined_call_operand.vmem [shape: f32[2,1,32], index: 5, kind: input, shape index: {}]
  %s6 = inlined_call_operand.vmem [shape: f32[2,1,32], index: 6, kind: input, shape index: {}]
  %s7 = inlined_call_operand.vmem [shape: bf16[2,32,256], index: 7, kind: input, shape index: {}]
  %s8 = inlined_call_operand.vmem [shape: f32[2,1,256], index: 8, kind: input, shape index: {}]
  %s9 = inlined_call_operand.vmem [shape: bf16[2,256,32], index: 9, kind: input, shape index: {}]
  %s10 = inlined_call_operand.vmem [shape: f32[2,1,32], index: 10, kind: input, shape index: {}]
  %s11 = inlined_call_operand.vmem [shape: f32[2,1,32], index: 11, kind: input, shape index: {}]
  %s12 = inlined_call_operand.vmem [shape: f32[2,1,32], index: 12, kind: input, shape index: {}]
  %s13 = inlined_call_operand.vmem [shape: f32[1,32], index: 13, kind: input, shape index: {}]
  %s14 = inlined_call_operand.vmem [shape: f32[1,32], index: 14, kind: input, shape index: {}]
  %s15 = inlined_call_operand.hbm [shape: f32[2,8,32], index: 15, kind: output, shape index: {}]
  %s16 = sld [smem:[#allocation0]]
  $region158: #{tpu_custom_call.1} parent=0
    _
  %s18 = ssub.s32 1, %s16
  %s19 = scalar_select 0, %s18, %s16
  $region1: #{tpu_custom_call.1} parent=0
    #allocation4 [shape = 'u8[16384]{0}', space=vmem, size = 0x4000, scoped, tag = 'input window, operand 7']
    #allocation5 [shape = 'u8[8192]{0}', space=vmem, size = 0x2000, scoped, tag = 'output window, operand 0']
    #allocation6 [shape = 's32[2]{0}', space=sflag, size = 0x8, scoped, tag = 'scoped memory for tpu_custom_call.1']
    %20 = vsyncpa [#allocation6], 0
    %s21 = scalar_lea.sflag [#allocation6], 1
    %22 = vsyncpa %s21, 0
    loop: start=0, step=1, limit=10
    $region2: #{tpu_custom_call.1} parent=1 // loop_pre_header
      _
    $region3: #{tpu_custom_call.1} parent=1 // loop_header
      %s24 = sphi 0, %s28
      %p25 = scmp.ge.s32.totalorder %s24, 10
      %s31 = sphi 0, %s50
      %s32 = sphi 0, %s46
      %s33 = sphi 0, %s42
      %s34 = sphi 0, %s31
      %s35 = sphi 0, %s32
      %s36 = sphi 0, %s33
      %s37 = sphi 0, %s34
      %s38 = sphi 0, %s35
      %s39 = sphi 0, %s36
      %s53 = sphi 0, %s55
      %s56 = sphi 0, %s53
      %s57 = sphi 0, %s56
      %s73 = sphi 0, %s57
      %s79 = sphi 0, %s81
      %s82 = sphi 0, %s79
      %s83 = sphi 0, %s82
      %s99 = sphi 0, %s83
      %s105 = sphi 0, %s107
      %s108 = sphi 0, %s105
      %s109 = sphi 0, %s108
      %s125 = sphi 0, %s109
      %s131 = sphi 0, %s133
      %s134 = sphi 0, %s131
      %s135 = sphi 0, %s134
      %s151 = sphi 0, %s135
      %s157 = sphi 0, %s159
      %s160 = sphi 0, %s157
      %s161 = sphi 0, %s160
      %s177 = sphi 0, %s161
      %s183 = sphi 0, %s185
      %s186 = sphi 0, %s183
      %s187 = sphi 0, %s186
      %s203 = sphi 0, %s187
      %s209 = sphi 0, %s211
      %s212 = sphi 0, %s209
      %s213 = sphi 0, %s212
      %s229 = sphi 0, %s213
      %s237 = sphi 0, %s239
      %s240 = sphi 0, %s237
      %s241 = sphi 0, %s240
      %s257 = sphi 0, %s241
      %s265 = sphi 0, %s267
      %s268 = sphi 0, %s265
      %s269 = sphi 0, %s268
      %s285 = sphi 0, %s269
      %s293 = sphi 0, %s295
      %s296 = sphi 0, %s293
      %s297 = sphi 0, %s296
      %s313 = sphi 0, %s297
      %s319 = sphi 0, %s321
      %s322 = sphi 0, %s319
      %s323 = sphi 0, %s322
      %s339 = sphi 0, %s323
      %s345 = sphi 0, %s347
      %s348 = sphi 0, %s345
      %s349 = sphi 0, %s348
      %s365 = sphi 0, %s349
      %s371 = sphi 0, %s373
      %s374 = sphi 0, %s371
      %s375 = sphi 0, %s374
      %s391 = sphi 0, %s375
      %s395 = sphi 0, %s395
      %s397 = sphi 0, %s395
      %s398 = sphi 0, %s397
      %s412 = sphi 0, %s398
      %s416 = sphi 0, %s416
      %s418 = sphi 0, %s416
      %s419 = sphi 0, %s418
      %s433 = sphi 0, %s419
      %s439 = sphi 0, %s441
      %s442 = sphi 0, %s439
      %s443 = sphi 0, %s442
      %s459 = sphi 0, %s443
    $region4: #{tpu_custom_call.1} parent=1 // loop_header_branch
      %27 = sbr.rel (%p25) target = $region8
    $region5: #{tpu_custom_call.1} parent=1 // loop_body
      %s29 = ssub.s32 %s24, 1
      %s30 = ssub.s32 %s24, 2
      %s40 = sadd.s32 1, %s33
      %p41 = scmp.ge.s32.totalorder %s40, 2
      %s42 = scalar_select %p41, 0, %s40
      %s43 = sadd.s32 1, %s32
      %s44 = scalar_select %p41, %s43, %s32
      %p45 = scmp.ge.s32.totalorder %s44, 2
      %s46 = scalar_select %p45, 0, %s44
      %s47 = sadd.s32 1, %s31
      %s48 = scalar_select %p45, %s47, %s31
      %p49 = scmp.ge.s32.totalorder %s48, 2
      %s50 = scalar_select %p49, 0, %s48
      %s51 = ssub.s32 %s31, %s50
      %p52 = scmp.eq.s32.totalorder %s51, 0
      %s54 = sadd.s32 %s53, 1
      %s55 = scalar_select %p52, %s53, %s54
      %p58 = pneg %p52
      %p59 = scmp.eq.s32.totalorder %s24, 7
      %p60 = por %p58, %p59
      %p61 = scmp.ne.s32.totalorder %s53, %s56
      %p62 = scmp.eq.s32.totalorder %s24, 0
      %p63 = por %p61, %p62
      %p64 = scmp.ne.s32.totalorder %s53, %s56
      %p65 = scmp.eq.s32.totalorder %s29, 7
      %p66 = por %p64, %p65
      %p67 = scmp.ne.s32.totalorder %s56, %s57
      %p68 = scmp.eq.s32.totalorder %s29, 0
      %p69 = por %p67, %p68
      %p70 = scmp.ne.s32.totalorder %s56, %s57
      %p71 = scmp.eq.s32.totalorder %s30, 7
      %p72 = por %p70, %p71
      %p74 = scmp.ne.s32.totalorder %s57, %s73
      %p75 = scmp.eq.s32.totalorder %s30, 0
      %p76 = por %p74, %p75
      %s77 = ssub.s32 %s32, %s46
      %p78 = scmp.eq.s32.totalorder %s77, 0
      %s80 = sadd.s32 %s79, 1
      %s81 = scalar_select %p78, %s79, %s80
      %p84 = pneg %p78
      %p85 = scmp.eq.s32.totalorder %s24, 7
      %p86 = por %p84, %p85
      %p87 = scmp.ne.s32.totalorder %s79, %s82
      %p88 = scmp.eq.s32.totalorder %s24, 0
      %p89 = por %p87, %p88
      %p90 = scmp.ne.s32.totalorder %s79, %s82
      %p91 = scmp.eq.s32.totalorder %s29, 7
      %p92 = por %p90, %p91
      %p93 = scmp.ne.s32.totalorder %s82, %s83
      %p94 = scmp.eq.s32.totalorder %s29, 0
      %p95 = por %p93, %p94
      %p96 = scmp.ne.s32.totalorder %s82, %s83
      %p97 = scmp.eq.s32.totalorder %s30, 7
      %p98 = por %p96, %p97
      %p100 = scmp.ne.s32.totalorder %s83, %s99
      %p101 = scmp.eq.s32.totalorder %s30, 0
      %p102 = por %p100, %p101
      %s103 = ssub.s32 %s32, %s46
      %p104 = scmp.eq.s32.totalorder %s103, 0
      %s106 = sadd.s32 %s105, 1
      %s107 = scalar_select %p104, %s105, %s106
      %p110 = pneg %p104
      %p111 = scmp.eq.s32.totalorder %s24, 7
      %p112 = por %p110, %p111
      %p113 = scmp.ne.s32.totalorder %s105, %s108
      %p114 = scmp.eq.s32.totalorder %s24, 0
      %p115 = por %p113, %p114
      %p116 = scmp.ne.s32.totalorder %s105, %s108
      %p117 = scmp.eq.s32.totalorder %s29, 7
      %p118 = por %p116, %p117
      %p119 = scmp.ne.s32.totalorder %s108, %s109
      %p120 = scmp.eq.s32.totalorder %s29, 0
      %p121 = por %p119, %p120
      %p122 = scmp.ne.s32.totalorder %s108, %s109
      %p123 = scmp.eq.s32.totalorder %s30, 7
      %p124 = por %p122, %p123
      %p126 = scmp.ne.s32.totalorder %s109, %s125
      %p127 = scmp.eq.s32.totalorder %s30, 0
      %p128 = por %p126, %p127
      %s129 = ssub.s32 %s32, %s46
      %p130 = scmp.eq.s32.totalorder %s129, 0
      %s132 = sadd.s32 %s131, 1
      %s133 = scalar_select %p130, %s131, %s132
      %p136 = pneg %p130
      %p137 = scmp.eq.s32.totalorder %s24, 7
      %p138 = por %p136, %p137
      %p139 = scmp.ne.s32.totalorder %s131, %s134
      %p140 = scmp.eq.s32.totalorder %s24, 0
      %p141 = por %p139, %p140
      %p142 = scmp.ne.s32.totalorder %s131, %s134
      %p143 = scmp.eq.s32.totalorder %s29, 7
      %p144 = por %p142, %p143
      %p145 = scmp.ne.s32.totalorder %s134, %s135
      %p146 = scmp.eq.s32.totalorder %s29, 0
      %p147 = por %p145, %p146
      %p148 = scmp.ne.s32.totalorder %s134, %s135
      %p149 = scmp.eq.s32.totalorder %s30, 7
      %p150 = por %p148, %p149
      %p152 = scmp.ne.s32.totalorder %s135, %s151
      %p153 = scmp.eq.s32.totalorder %s30, 0
      %p154 = por %p152, %p153
      %s155 = ssub.s32 %s32, %s46
      %p156 = scmp.eq.s32.totalorder %s155, 0
      %s158 = sadd.s32 %s157, 1
      %s159 = scalar_select %p156, %s157, %s158
      %p162 = pneg %p156
      %p163 = scmp.eq.s32.totalorder %s24, 7
      %p164 = por %p162, %p163
      %p165 = scmp.ne.s32.totalorder %s157, %s160
      %p166 = scmp.eq.s32.totalorder %s24, 0
      %p167 = por %p165, %p166
      %p168 = scmp.ne.s32.totalorder %s157, %s160
      %p169 = scmp.eq.s32.totalorder %s29, 7
      %p170 = por %p168, %p169
      %p171 = scmp.ne.s32.totalorder %s160, %s161
      %p172 = scmp.eq.s32.totalorder %s29, 0
      %p173 = por %p171, %p172
      %p174 = scmp.ne.s32.totalorder %s160, %s161
      %p175 = scmp.eq.s32.totalorder %s30, 7
      %p176 = por %p174, %p175
      %p178 = scmp.ne.s32.totalorder %s161, %s177
      %p179 = scmp.eq.s32.totalorder %s30, 0
      %p180 = por %p178, %p179
      %s181 = ssub.s32 %s32, %s46
      %p182 = scmp.eq.s32.totalorder %s181, 0
      %s184 = sadd.s32 %s183, 1
      %s185 = scalar_select %p182, %s183, %s184
      %p188 = pneg %p182
      %p189 = scmp.eq.s32.totalorder %s24, 7
      %p190 = por %p188, %p189
      %p191 = scmp.ne.s32.totalorder %s183, %s186
      %p192 = scmp.eq.s32.totalorder %s24, 0
      %p193 = por %p191, %p192
      %p194 = scmp.ne.s32.totalorder %s183, %s186
      %p195 = scmp.eq.s32.totalorder %s29, 7
      %p196 = por %p194, %p195
      %p197 = scmp.ne.s32.totalorder %s186, %s187
      %p198 = scmp.eq.s32.totalorder %s29, 0
      %p199 = por %p197, %p198
      %p200 = scmp.ne.s32.totalorder %s186, %s187
      %p201 = scmp.eq.s32.totalorder %s30, 7
      %p202 = por %p200, %p201
      %p204 = scmp.ne.s32.totalorder %s187, %s203
      %p205 = scmp.eq.s32.totalorder %s30, 0
      %p206 = por %p204, %p205
      %s207 = ssub.s32 %s32, %s46
      %p208 = scmp.eq.s32.totalorder %s207, 0
      %s210 = sadd.s32 %s209, 1
      %s211 = scalar_select %p208, %s209, %s210
      %p214 = pneg %p208
      %p215 = scmp.eq.s32.totalorder %s24, 7
      %p216 = por %p214, %p215
      %p217 = scmp.ne.s32.totalorder %s209, %s212
      %p218 = scmp.eq.s32.totalorder %s24, 0
      %p219 = por %p217, %p218
      %p220 = scmp.ne.s32.totalorder %s209, %s212
      %p221 = scmp.eq.s32.totalorder %s29, 7
      %p222 = por %p220, %p221
      %p223 = scmp.ne.s32.totalorder %s212, %s213
      %p224 = scmp.eq.s32.totalorder %s29, 0
      %p225 = por %p223, %p224
      %p226 = scmp.ne.s32.totalorder %s212, %s213
      %p227 = scmp.eq.s32.totalorder %s30, 7
      %p228 = por %p226, %p227
      %p230 = scmp.ne.s32.totalorder %s213, %s229
      %p231 = scmp.eq.s32.totalorder %s30, 0
      %p232 = por %p230, %p231
      %s233 = ssub.s32 %s32, %s46
      %s234 = ssub.s32 %s33, %s42
      %s235 = sor.u32 %s233, %s234
      %p236 = scmp.eq.s32.totalorder %s235, 0
      %s238 = sadd.s32 %s237, 1
      %s239 = scalar_select %p236, %s237, %s238
      %p242 = pneg %p236
      %p243 = scmp.eq.s32.totalorder %s24, 7
      %p244 = por %p242, %p243
      %p245 = scmp.ne.s32.totalorder %s237, %s240
      %p246 = scmp.eq.s32.totalorder %s24, 0
      %p247 = por %p245, %p246
      %p248 = scmp.ne.s32.totalorder %s237, %s240
      %p249 = scmp.eq.s32.totalorder %s29, 7
      %p250 = por %p248, %p249
      %p251 = scmp.ne.s32.totalorder %s240, %s241
      %p252 = scmp.eq.s32.totalorder %s29, 0
      %p253 = por %p251, %p252
      %p254 = scmp.ne.s32.totalorder %s240, %s241
      %p255 = scmp.eq.s32.totalorder %s30, 7
      %p256 = por %p254, %p255
      %p258 = scmp.ne.s32.totalorder %s241, %s257
      %p259 = scmp.eq.s32.totalorder %s30, 0
      %p260 = por %p258, %p259
      %s261 = ssub.s32 %s32, %s46
      %s262 = ssub.s32 %s33, %s42
      %s263 = sor.u32 %s261, %s262
      %p264 = scmp.eq.s32.totalorder %s263, 0
      %s266 = sadd.s32 %s265, 1
      %s267 = scalar_select %p264, %s265, %s266
      %p270 = pneg %p264
      %p271 = scmp.eq.s32.totalorder %s24, 7
      %p272 = por %p270, %p271
      %p273 = scmp.ne.s32.totalorder %s265, %s268
      %p274 = scmp.eq.s32.totalorder %s24, 0
      %p275 = por %p273, %p274
      %p276 = scmp.ne.s32.totalorder %s265, %s268
      %p277 = scmp.eq.s32.totalorder %s29, 7
      %p278 = por %p276, %p277
      %p279 = scmp.ne.s32.totalorder %s268, %s269
      %p280 = scmp.eq.s32.totalorder %s29, 0
      %p281 = por %p279, %p280
      %p282 = scmp.ne.s32.totalorder %s268, %s269
      %p283 = scmp.eq.s32.totalorder %s30, 7
      %p284 = por %p282, %p283
      %p286 = scmp.ne.s32.totalorder %s269, %s285
      %p287 = scmp.eq.s32.totalorder %s30, 0
      %p288 = por %p286, %p287
      %s289 = ssub.s32 %s32, %s46
      %s290 = ssub.s32 %s33, %s42
      %s291 = sor.u32 %s289, %s290
      %p292 = scmp.eq.s32.totalorder %s291, 0
      %s294 = sadd.s32 %s293, 1
      %s295 = scalar_select %p292, %s293, %s294
      %p298 = pneg %p292
      %p299 = scmp.eq.s32.totalorder %s24, 7
      %p300 = por %p298, %p299
      %p301 = scmp.ne.s32.totalorder %s293, %s296
      %p302 = scmp.eq.s32.totalorder %s24, 0
      %p303 = por %p301, %p302
      %p304 = scmp.ne.s32.totalorder %s293, %s296
      %p305 = scmp.eq.s32.totalorder %s29, 7
      %p306 = por %p304, %p305
      %p307 = scmp.ne.s32.totalorder %s296, %s297
      %p308 = scmp.eq.s32.totalorder %s29, 0
      %p309 = por %p307, %p308
      %p310 = scmp.ne.s32.totalorder %s296, %s297
      %p311 = scmp.eq.s32.totalorder %s30, 7
      %p312 = por %p310, %p311
      %p314 = scmp.ne.s32.totalorder %s297, %s313
      %p315 = scmp.eq.s32.totalorder %s30, 0
      %p316 = por %p314, %p315
      %s317 = ssub.s32 %s32, %s46
      %p318 = scmp.eq.s32.totalorder %s317, 0
      %s320 = sadd.s32 %s319, 1
      %s321 = scalar_select %p318, %s319, %s320
      %p324 = pneg %p318
      %p325 = scmp.eq.s32.totalorder %s24, 7
      %p326 = por %p324, %p325
      %p327 = scmp.ne.s32.totalorder %s319, %s322
      %p328 = scmp.eq.s32.totalorder %s24, 0
      %p329 = por %p327, %p328
      %p330 = scmp.ne.s32.totalorder %s319, %s322
      %p331 = scmp.eq.s32.totalorder %s29, 7
      %p332 = por %p330, %p331
      %p333 = scmp.ne.s32.totalorder %s322, %s323
      %p334 = scmp.eq.s32.totalorder %s29, 0
      %p335 = por %p333, %p334
      %p336 = scmp.ne.s32.totalorder %s322, %s323
      %p337 = scmp.eq.s32.totalorder %s30, 7
      %p338 = por %p336, %p337
      %p340 = scmp.ne.s32.totalorder %s323, %s339
      %p341 = scmp.eq.s32.totalorder %s30, 0
      %p342 = por %p340, %p341
      %s343 = ssub.s32 %s32, %s46
      %p344 = scmp.eq.s32.totalorder %s343, 0
      %s346 = sadd.s32 %s345, 1
      %s347 = scalar_select %p344, %s345, %s346
      %p350 = pneg %p344
      %p351 = scmp.eq.s32.totalorder %s24, 7
      %p352 = por %p350, %p351
      %p353 = scmp.ne.s32.totalorder %s345, %s348
      %p354 = scmp.eq.s32.totalorder %s24, 0
      %p355 = por %p353, %p354
      %p356 = scmp.ne.s32.totalorder %s345, %s348
      %p357 = scmp.eq.s32.totalorder %s29, 7
      %p358 = por %p356, %p357
      %p359 = scmp.ne.s32.totalorder %s348, %s349
      %p360 = scmp.eq.s32.totalorder %s29, 0
      %p361 = por %p359, %p360
      %p362 = scmp.ne.s32.totalorder %s348, %s349
      %p363 = scmp.eq.s32.totalorder %s30, 7
      %p364 = por %p362, %p363
      %p366 = scmp.ne.s32.totalorder %s349, %s365
      %p367 = scmp.eq.s32.totalorder %s30, 0
      %p368 = por %p366, %p367
      %s369 = ssub.s32 %s32, %s46
      %p370 = scmp.eq.s32.totalorder %s369, 0
      %s372 = sadd.s32 %s371, 1
      %s373 = scalar_select %p370, %s371, %s372
      %p376 = pneg %p370
      %p377 = scmp.eq.s32.totalorder %s24, 7
      %p378 = por %p376, %p377
      %p379 = scmp.ne.s32.totalorder %s371, %s374
      %p380 = scmp.eq.s32.totalorder %s24, 0
      %p381 = por %p379, %p380
      %p382 = scmp.ne.s32.totalorder %s371, %s374
      %p383 = scmp.eq.s32.totalorder %s29, 7
      %p384 = por %p382, %p383
      %p385 = scmp.ne.s32.totalorder %s374, %s375
      %p386 = scmp.eq.s32.totalorder %s29, 0
      %p387 = por %p385, %p386
      %p388 = scmp.ne.s32.totalorder %s374, %s375
      %p389 = scmp.eq.s32.totalorder %s30, 7
      %p390 = por %p388, %p389
      %p392 = scmp.ne.s32.totalorder %s375, %s391
      %p393 = scmp.eq.s32.totalorder %s30, 0
      %p394 = por %p392, %p393
      %s396 = sadd.s32 %s395, 1
      %p399 = scmp.eq.s32.totalorder %s24, 7
      %p400 = scmp.ne.s32.totalorder %s395, %s397
      %p401 = scmp.eq.s32.totalorder %s24, 0
      %p402 = por %p400, %p401
      %p403 = scmp.ne.s32.totalorder %s395, %s397
      %p404 = scmp.eq.s32.totalorder %s29, 7
      %p405 = por %p403, %p404
      %p406 = scmp.ne.s32.totalorder %s397, %s398
      %p407 = scmp.eq.s32.totalorder %s29, 0
      %p408 = por %p406, %p407
      %p409 = scmp.ne.s32.totalorder %s397, %s398
      %p410 = scmp.eq.s32.totalorder %s30, 7
      %p411 = por %p409, %p410
      %p413 = scmp.ne.s32.totalorder %s398, %s412
      %p414 = scmp.eq.s32.totalorder %s30, 0
      %p415 = por %p413, %p414
      %s417 = sadd.s32 %s416, 1
      %p420 = scmp.eq.s32.totalorder %s24, 7
      %p421 = scmp.ne.s32.totalorder %s416, %s418
      %p422 = scmp.eq.s32.totalorder %s24, 0
      %p423 = por %p421, %p422
      %p424 = scmp.ne.s32.totalorder %s416, %s418
      %p425 = scmp.eq.s32.totalorder %s29, 7
      %p426 = por %p424, %p425
      %p427 = scmp.ne.s32.totalorder %s418, %s419
      %p428 = scmp.eq.s32.totalorder %s29, 0
      %p429 = por %p427, %p428
      %p430 = scmp.ne.s32.totalorder %s418, %s419
      %p431 = scmp.eq.s32.totalorder %s30, 7
      %p432 = por %p430, %p431
      %p434 = scmp.ne.s32.totalorder %s419, %s433
      %p435 = scmp.eq.s32.totalorder %s30, 0
      %p436 = por %p434, %p435
      %s437 = ssub.s32 %s31, %s50
      %p438 = scmp.eq.s32.totalorder %s437, 0
      %s440 = sadd.s32 %s439, 1
      %s441 = scalar_select %p438, %s439, %s440
      %p444 = pneg %p438
      %p445 = scmp.eq.s32.totalorder %s24, 7
      %p446 = por %p444, %p445
      %p447 = scmp.ne.s32.totalorder %s439, %s442
      %p448 = scmp.eq.s32.totalorder %s24, 0
      %p449 = por %p447, %p448
      %p450 = scmp.ne.s32.totalorder %s439, %s442
      %p451 = scmp.eq.s32.totalorder %s29, 7
      %p452 = por %p450, %p451
      %p453 = scmp.ne.s32.totalorder %s442, %s443
      %p454 = scmp.eq.s32.totalorder %s29, 0
      %p455 = por %p453, %p454
      %p456 = scmp.ne.s32.totalorder %s442, %s443
      %p457 = scmp.eq.s32.totalorder %s30, 7
      %p458 = por %p456, %p457
      %p460 = scmp.ne.s32.totalorder %s443, %s459
      %p461 = scmp.eq.s32.totalorder %s30, 0
      %p462 = por %p460, %p461
      %p463 = scmp.le.s32.totalorder 1, %s24
      %p464 = scmp.lt.s32.totalorder %s24, 9
      %p465 = pnand %p463, %p464
      %p466 = pneg %p465
      // Predicated region
      $region9: #{tpu_custom_call.1} parent=5 // pred_check
        _
      $region10: #{tpu_custom_call.1} parent=5 // pred_check_branch
        %468 = sbr.rel (%p465) target = $region12
      $region11: #{tpu_custom_call.1} parent=5 // pred_region
        %s469 = ssub.s32 %s24, 1
        // Predicated region
        $region13: #{tpu_custom_call.1} parent=11 // pred_check
          %p470 = pneg %p408
        $region14: #{tpu_custom_call.1} parent=11 // pred_check_branch
          %472 = sbr.rel (%p470) target = $region16
        $region15: #{tpu_custom_call.1} parent=11 // pred_region
          _
        $region16: #{tpu_custom_call.1} parent=11 // pred_fallthru
          _
        // Predicated region
        $region17: #{tpu_custom_call.1} parent=11 // pred_check
          %p473 = pneg %p429
        $region18: #{tpu_custom_call.1} parent=11 // pred_check_branch
          %475 = sbr.rel (%p473) target = $region20
        $region19: #{tpu_custom_call.1} parent=11 // pred_region
          _
        $region20: #{tpu_custom_call.1} parent=11 // pred_fallthru
          _
      $region12: #{tpu_custom_call.1} parent=5 // pred_fallthru
        _
      %p476 = scmp.lt.s32.totalorder %s24, 8
      // Predicated region
      $region21: #{tpu_custom_call.1} parent=5 // pred_check
        %p477 = pneg %p476
      $region22: #{tpu_custom_call.1} parent=5 // pred_check_branch
        %479 = sbr.rel (%p477) target = $region24
      $region23: #{tpu_custom_call.1} parent=5 // pred_region
        // Predicated region
        $region25: #{tpu_custom_call.1} parent=23 // pred_check
          %p480 = pneg %p63
        $region26: #{tpu_custom_call.1} parent=23 // pred_check_branch
          %482 = sbr.rel (%p480) target = $region28
        $region27: #{tpu_custom_call.1} parent=23 // pred_region
          %p483 = scmp.lt.s32.totalorder %s31, 1
          %s484 = scalar_select %p483, %s31, 1
          %s485 = smul.addr %s484, 8
          %s486 = scalar_lea.vmem %s0, %s485
        $region28: #{tpu_custom_call.1} parent=23 // pred_fallthru
          _
        // Predicated region
        $region29: #{tpu_custom_call.1} parent=23 // pred_check
          %p487 = pneg %p89
        $region30: #{tpu_custom_call.1} parent=23 // pred_check_branch
          %489 = sbr.rel (%p487) target = $region32
        $region31: #{tpu_custom_call.1} parent=23 // pred_region
          %p490 = scmp.lt.s32.totalorder %s32, 1
          %s491 = scalar_select %p490, %s32, 1
          %s492 = smul.addr %s491, 4
          %s493 = smul.addr %s492, 4
          %s494 = scalar_lea.vmem %s1, %s493
        $region32: #{tpu_custom_call.1} parent=23 // pred_fallthru
          _
        // Predicated region
        $region33: #{tpu_custom_call.1} parent=23 // pred_check
          %p495 = pneg %p115
        $region34: #{tpu_custom_call.1} parent=23 // pred_check_branch
          %497 = sbr.rel (%p495) target = $region36
        $region35: #{tpu_custom_call.1} parent=23 // pred_region
          %p498 = scmp.lt.s32.totalorder %s32, 1
          %s499 = scalar_select %p498, %s32, 1
          %s500 = scalar_lea.vmem %s2, %s499
        $region36: #{tpu_custom_call.1} parent=23 // pred_fallthru
          _
        // Predicated region
        $region37: #{tpu_custom_call.1} parent=23 // pred_check
          %p501 = pneg %p141
        $region38: #{tpu_custom_call.1} parent=23 // pred_check_branch
          %503 = sbr.rel (%p501) target = $region40
        $region39: #{tpu_custom_call.1} parent=23 // pred_region
          %p504 = scmp.lt.s32.totalorder %s32, 1
          %s505 = scalar_select %p504, %s32, 1
          %s506 = smul.addr %s505, 4
          %s507 = smul.addr %s506, 4
          %s508 = scalar_lea.vmem %s3, %s507
        $region40: #{tpu_custom_call.1} parent=23 // pred_fallthru
          _
        // Predicated region
        $region41: #{tpu_custom_call.1} parent=23 // pred_check
          %p509 = pneg %p167
        $region42: #{tpu_custom_call.1} parent=23 // pred_check_branch
          %511 = sbr.rel (%p509) target = $region44
        $region43: #{tpu_custom_call.1} parent=23 // pred_region
          %p512 = scmp.lt.s32.totalorder %s32, 1
          %s513 = scalar_select %p512, %s32, 1
          %s514 = scalar_lea.vmem %s4, %s513
        $region44: #{tpu_custom_call.1} parent=23 // pred_fallthru
          _
        // Predicated region
        $region45: #{tpu_custom_call.1} parent=23 // pred_check
          %p515 = pneg %p193
        $region46: #{tpu_custom_call.1} parent=23 // pred_check_branch
          %517 = sbr.rel (%p515) target = $region48
        $region47: #{tpu_custom_call.1} parent=23 // pred_region
          %p518 = scmp.lt.s32.totalorder %s32, 1
          %s519 = scalar_select %p518, %s32, 1
          %s520 = scalar_lea.vmem %s5, %s519
        $region48: #{tpu_custom_call.1} parent=23 // pred_fallthru
          _
        // Predicated region
        $region49: #{tpu_custom_call.1} parent=23 // pred_check
          %p521 = pneg %p219
        $region50: #{tpu_custom_call.1} parent=23 // pred_check_branch
          %523 = sbr.rel (%p521) target = $region52
        $region51: #{tpu_custom_call.1} parent=23 // pred_region
          %p524 = scmp.lt.s32.totalorder %s32, 1
          %s525 = scalar_select %p524, %s32, 1
          %s526 = scalar_lea.vmem %s6, %s525
        $region52: #{tpu_custom_call.1} parent=23 // pred_fallthru
          _
        // Predicated region
        $region53: #{tpu_custom_call.1} parent=23 // pred_check
          %p527 = pneg %p247
        $region54: #{tpu_custom_call.1} parent=23 // pred_check_branch
          %529 = sbr.rel (%p527) target = $region56
        $region55: #{tpu_custom_call.1} parent=23 // pred_region
          %s530 = sand.u32 %s237, 1
          %s531 = sand.u32 %s237, 1
          %s532 = smul.addr %s531, 16
          %s533 = scalar_lea.vmem [#allocation4], %s532
          %s534 = smul.addr %s32, 8
          %s535 = sadd.s32 %s33, %s534
          %s536 = smul.addr %s535, 4
          %s537 = scalar_lea.vmem %s7, %s536
          // Predicated region
          $region57: #{tpu_custom_call.1} parent=55 // pred_check
            _
          $region58: #{tpu_custom_call.1} parent=55 // pred_check_branch
            %539 = sbr.rel (0) target = $region60
          $region59: #{tpu_custom_call.1} parent=55 // pred_region
            // Predicated region
            $region61: #{tpu_custom_call.1} parent=59 // pred_check
              _
            $region62: #{tpu_custom_call.1} parent=59 // pred_check_branch
              %541 = sbr.rel target = $region64
            $region63: #{tpu_custom_call.1} parent=59 // pred_region
              // Predicated region
              $region76: #{tpu_custom_call.1} parent=63 // pred_check
                _
              $region77: #{tpu_custom_call.1} parent=63 // pred_check_branch
                %563 = sbr.rel (0) target = $region79
              $region78: #{tpu_custom_call.1} parent=63 // pred_region
                loop: start=0, step=1, limit=1
                $region80: #{tpu_custom_call.1} parent=78 // loop_pre_header
                  _
                $region81: #{tpu_custom_call.1} parent=78 // loop_header
                  %s565 = sphi 0, %s569
                  %p566 = scmp.ge.s32.totalorder %s565, 1
                  %s570 = sphi %s537, %s537
                  %s571 = sphi %s533, %s533
                $region82: #{tpu_custom_call.1} parent=78 // loop_header_branch
                  %568 = sbr.rel (%p566) target = $region86
                $region83: #{tpu_custom_call.1} parent=78 // loop_body
                  _
                $region84: #{tpu_custom_call.1} parent=78 // loop_footer
                  %s569 = sadd.s32 1, %s565
                $region85: #{tpu_custom_call.1} parent=78 // loop_footer_branch
                  %564 = sbr.rel target = $region81
                $region86: #{tpu_custom_call.1} parent=78 // loop_exit
                  _
                %s573 = ssub.s32 16, 1
                loop: start=0, step=1, limit=1
                $region87: #{tpu_custom_call.1} parent=78 // loop_pre_header
                  _
                $region88: #{tpu_custom_call.1} parent=78 // loop_header
                  %s575 = sphi 0, %s579
                  %p576 = scmp.ge.s32.totalorder %s575, 1
                  %s580 = sphi %s537, %s537
                  %s581 = sphi %s533, %s533
                $region89: #{tpu_custom_call.1} parent=78 // loop_header_branch
                  %578 = sbr.rel (%p576) target = $region93
                $region90: #{tpu_custom_call.1} parent=78 // loop_body
                  %v582 = vld [vmem:[%s580] sm:%s573]
                  %583 = vst [vmem:[%s581] sm:%s573] %v582
                  %v584 = vld [vmem:[%s580 + $0x8] sm:%s573]
                  %585 = vst [vmem:[%s581 + $0x4] sm:%s573] %v584
                  %v586 = vld [vmem:[%s580 + $0x10] sm:%s573]
                  %587 = vst [vmem:[%s581 + $0x8] sm:%s573] %v586
                  %v588 = vld [vmem:[%s580 + $0x18] sm:%s573]
                  %589 = vst [vmem:[%s581 + $0xc] sm:%s573] %v588
                $region91: #{tpu_custom_call.1} parent=78 // loop_footer
                  %s579 = sadd.s32 1, %s575
                $region92: #{tpu_custom_call.1} parent=78 // loop_footer_branch
                  %574 = sbr.rel target = $region88
                $region93: #{tpu_custom_call.1} parent=78 // loop_exit
                  _
              $region79: #{tpu_custom_call.1} parent=63 // pred_fallthru
                _
            $region64: #{tpu_custom_call.1} parent=59 // pred_fallthru
              _
            // Predicated region
            $region65: #{tpu_custom_call.1} parent=59 // pred_check
              _
            $region66: #{tpu_custom_call.1} parent=59 // pred_check_branch
              %543 = sbr.rel (0) target = $region68
            $region67: #{tpu_custom_call.1} parent=59 // pred_region
              %s545 = ssub.s32 16, 1
              loop: start=0, step=1, limit=1
              $region69: #{tpu_custom_call.1} parent=67 // loop_pre_header
                _
              $region70: #{tpu_custom_call.1} parent=67 // loop_header
                %s547 = sphi 0, %s551
                %p548 = scmp.ge.s32.totalorder %s547, 1
                %s552 = sphi %s537, %s537
                %s553 = sphi %s533, %s533
              $region71: #{tpu_custom_call.1} parent=67 // loop_header_branch
                %550 = sbr.rel (%p548) target = $region75
              $region72: #{tpu_custom_call.1} parent=67 // loop_body
                %v554 = vld [vmem:[%s552] sm:%s545]
                %555 = vst [vmem:[%s553] sm:%s545] %v554
                %v556 = vld [vmem:[%s552 + $0x8] sm:%s545]
                %557 = vst [vmem:[%s553 + $0x4] sm:%s545] %v556
                %v558 = vld [vmem:[%s552 + $0x10] sm:%s545]
                %559 = vst [vmem:[%s553 + $0x8] sm:%s545] %v558
                %v560 = vld [vmem:[%s552 + $0x18] sm:%s545]
                %561 = vst [vmem:[%s553 + $0xc] sm:%s545] %v560
              $region73: #{tpu_custom_call.1} parent=67 // loop_footer
                %s551 = sadd.s32 1, %s547
              $region74: #{tpu_custom_call.1} parent=67 // loop_footer_branch
                %546 = sbr.rel target = $region70
              $region75: #{tpu_custom_call.1} parent=67 // loop_exit
                _
            $region68: #{tpu_custom_call.1} parent=59 // pred_fallthru
              _
          $region60: #{tpu_custom_call.1} parent=55 // pred_fallthru
            _
          %590 = vnop
        $region56: #{tpu_custom_call.1} parent=23 // pred_fallthru
          _
        // Predicated region
        $region94: #{tpu_custom_call.1} parent=23 // pred_check
          %p591 = pneg %p275
        $region95: #{tpu_custom_call.1} parent=23 // pred_check_branch
          %593 = sbr.rel (%p591) target = $region97
        $region96: #{tpu_custom_call.1} parent=23 // pred_region
          %p594 = scmp.lt.s32.totalorder %s32, 1
          %s595 = scalar_select %p594, %s32, 1
          %p596 = scmp.lt.s32.totalorder %s33, 1
          %s597 = scalar_select %p596, %s33, 1
          %s598 = smul.addr %s595, 2
          %s599 = sadd.s32 %s597, %s598
          %s600 = scalar_lea.vmem %s8, %s599
        $region97: #{tpu_custom_call.1} parent=23 // pred_fallthru
          _
        // Predicated region
        $region98: #{tpu_custom_call.1} parent=23 // pred_check
          %p601 = pneg %p303
        $region99: #{tpu_custom_call.1} parent=23 // pred_check_branch
          %603 = sbr.rel (%p601) target = $region101
        $region100: #{tpu_custom_call.1} parent=23 // pred_region
          %s604 = smul.u32 16, %s33
          %p605 = scmp.lt.s32.totalorder %s32, 1
          %s606 = scalar_select %p605, %s32, 1
          %p607 = scmp.lt.s32.totalorder %s604, 31
          %s608 = scalar_select %p607, %s604, 31
          %s609 = smul.addr %s606, 32
          %s610 = sadd.s32 %s608, %s609
          %s611 = smul.addr %s610, 4
          %s612 = scalar_lea.vmem %s9, %s611
          %s613 = smul.u32 16, %s33
        $region101: #{tpu_custom_call.1} parent=23 // pred_fallthru
          _
        // Predicated region
        $region102: #{tpu_custom_call.1} parent=23 // pred_check
          %p614 = pneg %p329
        $region103: #{tpu_custom_call.1} parent=23 // pred_check_branch
          %616 = sbr.rel (%p614) target = $region105
        $region104: #{tpu_custom_call.1} parent=23 // pred_region
          %p617 = scmp.lt.s32.totalorder %s32, 1
          %s618 = scalar_select %p617, %s32, 1
          %s619 = scalar_lea.vmem %s10, %s618
        $region105: #{tpu_custom_call.1} parent=23 // pred_fallthru
          _
        // Predicated region
        $region106: #{tpu_custom_call.1} parent=23 // pred_check
          %p620 = pneg %p355
        $region107: #{tpu_custom_call.1} parent=23 // pred_check_branch
          %622 = sbr.rel (%p620) target = $region109
        $region108: #{tpu_custom_call.1} parent=23 // pred_region
          %p623 = scmp.lt.s32.totalorder %s32, 1
          %s624 = scalar_select %p623, %s32, 1
          %s625 = scalar_lea.vmem %s11, %s624
        $region109: #{tpu_custom_call.1} parent=23 // pred_fallthru
          _
        // Predicated region
        $region110: #{tpu_custom_call.1} parent=23 // pred_check
          %p626 = pneg %p381
        $region111: #{tpu_custom_call.1} parent=23 // pred_check_branch
          %628 = sbr.rel (%p626) target = $region113
        $region112: #{tpu_custom_call.1} parent=23 // pred_region
          %p629 = scmp.lt.s32.totalorder %s32, 1
          %s630 = scalar_select %p629, %s32, 1
          %s631 = scalar_lea.vmem %s12, %s630
        $region113: #{tpu_custom_call.1} parent=23 // pred_fallthru
          _
      $region24: #{tpu_custom_call.1} parent=5 // pred_fallthru
        _
      %p632 = scmp.le.s32.totalorder 1, %s24
      %p633 = scmp.lt.s32.totalorder %s24, 9
      %p634 = pnand %p632, %p633
      %p635 = pneg %p634
      // Predicated region
      $region114: #{tpu_custom_call.1} parent=5 // pred_check
        _
      $region115: #{tpu_custom_call.1} parent=5 // pred_check_branch
        %637 = sbr.rel (%p634) target = $region117
      $region116: #{tpu_custom_call.1} parent=5 // pred_region
        %s638 = ssub.s32 %s24, 1
        %s639 = sand.u32 %s240, 1
        %s640 = sand.u32 %s240, 1
        %s641 = smul.addr %s640, 16
        %s642 = scalar_lea.vmem [#allocation4], %s641
        // Predicated region
        $region118: #{tpu_custom_call.1} parent=116 // pred_check
          %p643 = pneg %p253
        $region119: #{tpu_custom_call.1} parent=116 // pred_check_branch
          %645 = sbr.rel (%p643) target = $region121
        $region120: #{tpu_custom_call.1} parent=116 // pred_region
          _
        $region121: #{tpu_custom_call.1} parent=116 // pred_fallthru
          _
        %p646 = scmp.lt.s32.totalorder %s34, 1
        %s647 = scalar_select %p646, %s34, 1
        %s648 = smul.addr %s647, 8
        %s649 = scalar_lea.vmem %s0, %s648
        %p650 = pneg %p69
        %p651 = pneg %p66
        %p652 = scmp.lt.s32.totalorder %s35, 1
        %s653 = scalar_select %p652, %s35, 1
        %s654 = smul.addr %s653, 4
        %s655 = smul.addr %s654, 4
        %s656 = scalar_lea.vmem %s1, %s655
        %p657 = pneg %p95
        %p658 = pneg %p92
        %p659 = scmp.lt.s32.totalorder %s35, 1
        %s660 = scalar_select %p659, %s35, 1
        %s661 = scalar_lea.vmem %s2, %s660
        %p662 = pneg %p121
        %p663 = pneg %p118
        %p664 = scmp.lt.s32.totalorder %s35, 1
        %s665 = scalar_select %p664, %s35, 1
        %s666 = smul.addr %s665, 4
        %s667 = smul.addr %s666, 4
        %s668 = scalar_lea.vmem %s3, %s667
        %p669 = pneg %p147
        %p670 = pneg %p144
        %p671 = scmp.lt.s32.totalorder %s35, 1
        %s672 = scalar_select %p671, %s35, 1
        %s673 = scalar_lea.vmem %s4, %s672
        %p674 = pneg %p173
        %p675 = pneg %p170
        %p676 = scmp.lt.s32.totalorder %s35, 1
        %s677 = scalar_select %p676, %s35, 1
        %s678 = scalar_lea.vmem %s5, %s677
        %p679 = pneg %p199
        %p680 = pneg %p196
        %p681 = scmp.lt.s32.totalorder %s35, 1
        %s682 = scalar_select %p681, %s35, 1
        %s683 = scalar_lea.vmem %s6, %s682
        %p684 = pneg %p225
        %p685 = pneg %p222
        %s686 = sand.u32 %s240, 1
        %s687 = sand.u32 %s240, 1
        %s688 = smul.addr %s687, 16
        %s689 = scalar_lea.vmem [#allocation4], %s688
        %p690 = pneg %p253
        %p691 = pneg %p250
        %p692 = scmp.lt.s32.totalorder %s35, 1
        %s693 = scalar_select %p692, %s35, 1
        %p694 = scmp.lt.s32.totalorder %s36, 1
        %s695 = scalar_select %p694, %s36, 1
        %s696 = smul.addr %s693, 2
        %s697 = sadd.s32 %s695, %s696
        %s698 = scalar_lea.vmem %s8, %s697
        %p699 = pneg %p281
        %p700 = pneg %p278
        %s701 = smul.u32 16, %s36
        %p702 = scmp.lt.s32.totalorder %s35, 1
        %s703 = scalar_select %p702, %s35, 1
        %p704 = scmp.lt.s32.totalorder %s701, 31
        %s705 = scalar_select %p704, %s701, 31
        %s706 = smul.addr %s703, 32
        %s707 = sadd.s32 %s705, %s706
        %s708 = smul.addr %s707, 4
        %s709 = scalar_lea.vmem %s9, %s708
        %p710 = pneg %p309
        %p711 = pneg %p306
        %p712 = scmp.lt.s32.totalorder %s35, 1
        %s713 = scalar_select %p712, %s35, 1
        %s714 = scalar_lea.vmem %s10, %s713
        %p715 = pneg %p335
        %p716 = pneg %p332
        %p717 = scmp.lt.s32.totalorder %s35, 1
        %s718 = scalar_select %p717, %s35, 1
        %s719 = scalar_lea.vmem %s11, %s718
        %p720 = pneg %p361
        %p721 = pneg %p358
        %p722 = scmp.lt.s32.totalorder %s35, 1
        %s723 = scalar_select %p722, %s35, 1
        %s724 = scalar_lea.vmem %s12, %s723
        %p725 = pneg %p387
        %p726 = pneg %p384
        %p727 = pneg %p408
        %p728 = pneg %p405
        %p729 = pneg %p429
        %p730 = pneg %p426
        %p731 = pneg %p455
        %p732 = pneg %p452
        %s733 = sand.u32 %s442, 1
        %s734 = scalar_lea.sflag [#allocation6], %s733
        %s735 = sand.u32 %s442, 1
        %s736 = smul.addr %s735, 8
        %s737 = scalar_lea.vmem [#allocation5], %s736
        %p738 = scmp.lt.s32.totalorder %s34, 1
        %s739 = scalar_select %p738, %s34, 1
        %s740 = smul.addr %s739, 8
        %s741 = scalar_lea.vmem %s0, %s740
        %p742 = scmp.lt.s32.totalorder %s35, 1
        %s743 = scalar_select %p742, %s35, 1
        %s744 = smul.addr %s743, 4
        %s745 = smul.addr %s744, 4
        %s746 = scalar_lea.vmem %s1, %s745
        %p747 = scmp.lt.s32.totalorder %s35, 1
        %s748 = scalar_select %p747, %s35, 1
        %s749 = scalar_lea.vmem %s2, %s748
        %p750 = scmp.lt.s32.totalorder %s35, 1
        %s751 = scalar_select %p750, %s35, 1
        %s752 = smul.addr %s751, 4
        %s753 = smul.addr %s752, 4
        %s754 = scalar_lea.vmem %s3, %s753
        %p755 = scmp.lt.s32.totalorder %s35, 1
        %s756 = scalar_select %p755, %s35, 1
        %s757 = scalar_lea.vmem %s4, %s756
        %p758 = scmp.lt.s32.totalorder %s35, 1
        %s759 = scalar_select %p758, %s35, 1
        %s760 = scalar_lea.vmem %s5, %s759
        %p761 = scmp.lt.s32.totalorder %s35, 1
        %s762 = scalar_select %p761, %s35, 1
        %s763 = scalar_lea.vmem %s6, %s762
        %p764 = scmp.lt.s32.totalorder %s35, 1
        %s765 = scalar_select %p764, %s35, 1
        %p766 = scmp.lt.s32.totalorder %s36, 1
        %s767 = scalar_select %p766, %s36, 1
        %s768 = smul.addr %s765, 2
        %s769 = sadd.s32 %s767, %s768
        %s770 = scalar_lea.vmem %s8, %s769
        %s771 = smul.u32 16, %s36
        %p772 = scmp.lt.s32.totalorder %s35, 1
        %s773 = scalar_select %p772, %s35, 1
        %p774 = scmp.lt.s32.totalorder %s771, 31
        %s775 = scalar_select %p774, %s771, 31
        %s776 = smul.addr %s773, 32
        %s777 = sadd.s32 %s775, %s776
        %s778 = smul.addr %s777, 4
        %s779 = scalar_lea.vmem %s9, %s778
        %s780 = smul.u32 16, %s36
        %p781 = scmp.lt.s32.totalorder %s35, 1
        %s782 = scalar_select %p781, %s35, 1
        %s783 = scalar_lea.vmem %s10, %s782
        %p784 = scmp.lt.s32.totalorder %s35, 1
        %s785 = scalar_select %p784, %s35, 1
        %s786 = scalar_lea.vmem %s11, %s785
        %p787 = scmp.lt.s32.totalorder %s35, 1
        %s788 = scalar_select %p787, %s35, 1
        %s789 = scalar_lea.vmem %s12, %s788
        %p791 = scmp.eq.s32.totalorder %s35, 0
        %p792 = scmp.eq.s32.totalorder %s36, 0
        %p793 = pnand %p791, %p792
        %p794 = pneg %p793
        // Predicated region
        $region122: #{tpu_custom_call.1} parent=116 // pred_check
          _
        $region123: #{tpu_custom_call.1} parent=116 // pred_check_branch
          %796 = sbr.rel (%p793) target = $region125
        $region124: #{tpu_custom_call.1} parent=116 // pred_region
          %v797 = vld [vmem:[%s741] sm:$0xff]
          %vm798 = vcmask 261120
          %799 = vst.msk [vmem:[%s737] sm:$0xff] %vm798, %v797
        $region125: #{tpu_custom_call.1} parent=116 // pred_fallthru
          _
        // Predicated region
        $region126: #{tpu_custom_call.1} parent=116 // pred_check
          %p800 = pneg %p792
        $region127: #{tpu_custom_call.1} parent=116 // pred_check_branch
          %802 = sbr.rel (%p800) target = $region129
        $region128: #{tpu_custom_call.1} parent=116 // pred_region
          %v803 = vld [vmem:[%s737] sm:$0xff]
          %v804 = vpack.c.bf16 %v803, %v803
          %v805 = vld [vmem:[%s746] sm:$0xf]
          %v806 = vld [vmem:[%s746 + $0x4] sm:$0xf]
          %v807 = vld [vmem:[%s746 + $0x8] sm:$0xf]
          %v808 = vld [vmem:[%s746 + $0xc] sm:$0xf]
          %v809 = vld [vmem:[%s749] sm:$0x1]
          %v811 = vlaneseq
          %v812 = vshrl.u32 %v811, 7
          %v813 = vsub.s32 0, %v812
          %v814 = vrot.slane %v809, %v813
          %v820 = vunpack.c.l.b16 %v805
          %v821 = vunpack.c.l.b16 %v806
          %v822 = vunpack.c.l.b16 %v807
          %v823 = vunpack.c.l.b16 %v808
          %v824 = vpack.c.b16 %v821, %v820
          %v825 = vpack.c.b16 %v823, %v822
          %vm828 = vcmask 261120
          %v830 = vsel %vm828, %v804, 0
          %832 = vmatprep.subr.bf16.mxu0 0
          %833 = vmatpush1.bf16.msra.mxu0 0
          %834 = vmatprep.subr.bf16.mxu0 0
          %835 = vmatpush1.bf16.msra.mxu0 0
          %836 = vmatprep.subr.bf16.mxu0 0
          %837 = vmatpush1.bf16.msra.mxu0 0
          %838 = vmatprep.subr.bf16.mxu0 0
          %839 = vmatpush1.bf16.msra.mxu0 0
          %840 = vmatprep.subr.bf16.mxu0 0
          %841 = vmatpush1.bf16.msra.mxu0 0
          %842 = vmatprep.subr.bf16.mxu0 0
          %843 = vmatpush1.bf16.msra.mxu0 0
          %844 = vmatprep.subr.bf16.mxu0 0
          %845 = vmatpush1.bf16.msra.mxu0 %v825
          %846 = vmatprep.subr.bf16.mxu0 0
          %847 = vmatpush1.bf16.msra.mxu0 %v824
          %848 = vmatprep.subr.bf16.mxu0 0
          %849 = vmatpush2.bf16.msra.mxu0 0
          %850 = vmatprep.subr.bf16.mxu0 0
          %851 = vmatpush2.bf16.msra.mxu0 0
          %852 = vmatprep.subr.bf16.mxu0 0
          %853 = vmatpush2.bf16.msra.mxu0 0
          %854 = vmatprep.subr.bf16.mxu0 0
          %855 = vmatpush2.bf16.msra.mxu0 0
          %856 = vmatprep.subr.bf16.mxu0 0
          %857 = vmatpush2.bf16.msra.mxu0 0
          %858 = vmatprep.subr.bf16.mxu0 0
          %859 = vmatpush2.bf16.msra.mxu0 0
          %860 = vmatprep.subr.bf16.mxu0 0
          %861 = vmatpush2.bf16.msra.mxu0 0
          %862 = vmatprep.subr.bf16.mxu0 0
          %863 = vmatpush2.bf16.msra.mxu0 0
          %864 = vmatprep.mubr.bf16.mxu0 0
          %865 = vmatmul.mubr.bf16.gmra.mxu0 %v830
          %v866 = vpop.f32.mrf.mxu0
          %v867 = vadd.f32 %v814, %v866
          %v868 = vpop.f32.mrf.mxu0
          %v869 = vpop.f32.mrf.mxu0
          %v870 = vpop.f32.mrf.mxu0
          %871 = vdwg.mxu0
          %v872 = vld [vmem:[%s754] sm:$0xf]
          %v873 = vld [vmem:[%s754 + $0x4] sm:$0xf]
          %v874 = vld [vmem:[%s754 + $0x8] sm:$0xf]
          %v875 = vld [vmem:[%s754 + $0xc] sm:$0xf]
          %v876 = vpack.c.bf16 %v867, %v867
          %878 = vrot.lane.b32.xlu0 %v876, 96
          %v879 = vpop.permute.xlu0 %878
          %vm880 = vcmask 64512
          %v882 = vsel %vm880, %v876, 0
          %v885 = vsel %vm880, %v879, 0
          %887 = vmatprep.subr.bf16.mxu0 0
          %888 = vmatpush1.bf16.xpose.msra.mxu0 0
          %889 = vmatprep.subr.bf16.mxu0 0
          %890 = vmatpush1.bf16.xpose.msra.mxu0 0
          %891 = vmatprep.subr.bf16.mxu0 0
          %892 = vmatpush1.bf16.xpose.msra.mxu0 0
          %893 = vmatprep.subr.bf16.mxu0 0
          %894 = vmatpush1.bf16.xpose.msra.mxu0 0
          %895 = vmatprep.subr.bf16.mxu0 0
          %896 = vmatpush1.bf16.xpose.msra.mxu0 0
          %897 = vmatprep.subr.bf16.mxu0 0
          %898 = vmatpush1.bf16.xpose.msra.mxu0 0
          %899 = vmatprep.subr.bf16.mxu0 0
          %900 = vmatpush1.bf16.xpose.msra.mxu0 0
          %901 = vmatprep.subr.bf16.mxu0 0
          %902 = vmatpush1.bf16.xpose.msra.mxu0 %v885
          %903 = vmatprep.subr.bf16.mxu0 0
          %904 = vmatpush2.bf16.xpose.msra.mxu0 0
          %905 = vmatprep.subr.bf16.mxu0 0
          %906 = vmatpush2.bf16.xpose.msra.mxu0 0
          %907 = vmatprep.subr.bf16.mxu0 0
          %908 = vmatpush2.bf16.xpose.msra.mxu0 0
          %909 = vmatprep.subr.bf16.mxu0 0
          %910 = vmatpush2.bf16.xpose.msra.mxu0 0
          %911 = vmatprep.subr.bf16.mxu0 0
          %912 = vmatpush2.bf16.xpose.msra.mxu0 0
          %913 = vmatprep.subr.bf16.mxu0 0
          %914 = vmatpush2.bf16.xpose.msra.mxu0 0
          %915 = vmatprep.subr.bf16.mxu0 0
          %916 = vmatpush2.bf16.xpose.msra.mxu0 0
          %917 = vmatprep.subr.bf16.mxu0 0
          %918 = vmatpush2.bf16.xpose.msra.mxu0 0
          %919 = vmatprep.mubr.bf16.mxu0 0
          %920 = vmatmul.mubr.bf16.gmra.mxu0 %v882
          %v921 = vpop.f32.mrf.mxu0
          %v922 = vadd.f32 0.0, %v921
          %v923 = vpop.f32.mrf.mxu0
          %v924 = vpop.f32.mrf.mxu0
          %v925 = vpop.f32.mrf.mxu0
          %926 = vdwg.mxu0
          %v927 = vmul.f32 %v922, 0.35355338
          %v928 = vsel %vm880, %v927, -inf
          %929 = vmax.xlane.f32.xlu0 %v928
          %v930 = vpop.xlane.xlu0 %929
          %v931 = vsub.f32 %v927, %v930
          %v932 = vmul.f32 %v931, 1.442695
          %v933 = vpow.pop %v932
          %v934 = vsel %vm880, %v933, 0.0
          %935 = vadd.xlane.f32.xlu0 %v934
          %v936 = vpop.xlane.xlu0 %935
          %v937 = vrcp.pop %v936
          %v938 = vmul.f32 %v933, %v937
          %v939 = vpack.c.bf16 %v938, %v938
          %940 = vrot.lane.b32.xlu0 %v876, 64
          %v941 = vpop.permute.xlu0 %940
          %v943 = vsel %vm880, %v939, 0
          %vm945 = vcmask 1043456
          %v947 = vsel %vm945, %v941, 0
          %949 = vmatprep.subr.bf16.mxu0 0
          %950 = vmatpush1.bf16.msra.mxu0 0
          %951 = vmatprep.subr.bf16.mxu0 0
          %952 = vmatpush1.bf16.msra.mxu0 0
          %953 = vmatprep.subr.bf16.mxu0 0
          %954 = vmatpush1.bf16.msra.mxu0 0
          %955 = vmatprep.subr.bf16.mxu0 0
          %956 = vmatpush1.bf16.msra.mxu0 0
          %957 = vmatprep.subr.bf16.mxu0 0
          %958 = vmatpush1.bf16.msra.mxu0 0
          %959 = vmatprep.subr.bf16.mxu0 0
          %960 = vmatpush1.bf16.msra.mxu0 0
          %961 = vmatprep.subr.bf16.mxu0 0
          %962 = vmatpush1.bf16.msra.mxu0 0
          %963 = vmatprep.subr.bf16.mxu0 0
          %964 = vmatpush1.bf16.msra.mxu0 %v947
          %965 = vmatprep.subr.bf16.mxu0 0
          %966 = vmatpush2.bf16.msra.mxu0 0
          %967 = vmatprep.subr.bf16.mxu0 0
          %968 = vmatpush2.bf16.msra.mxu0 0
          %969 = vmatprep.subr.bf16.mxu0 0
          %970 = vmatpush2.bf16.msra.mxu0 0
          %971 = vmatprep.subr.bf16.mxu0 0
          %972 = vmatpush2.bf16.msra.mxu0 0
          %973 = vmatprep.subr.bf16.mxu0 0
          %974 = vmatpush2.bf16.msra.mxu0 0
          %975 = vmatprep.subr.bf16.mxu0 0
          %976 = vmatpush2.bf16.msra.mxu0 0
          %977 = vmatprep.subr.bf16.mxu0 0
          %978 = vmatpush2.bf16.msra.mxu0 0
          %979 = vmatprep.subr.bf16.mxu0 0
          %980 = vmatpush2.bf16.msra.mxu0 0
          %981 = vmatprep.mubr.bf16.mxu0 0
          %982 = vmatmul.mubr.bf16.gmra.mxu0 %v943
          %v983 = vpop.f32.mrf.mxu0
          %v984 = vadd.f32 0.0, %v983
          %v985 = vpop.f32.mrf.mxu0
          %v986 = vpop.f32.mrf.mxu0
          %v987 = vpop.f32.mrf.mxu0
          %988 = vdwg.mxu0
          %v989 = vpack.c.bf16 %v984, %v984
          %990 = vrot.lane.b32.xlu0 %v876, 120
          %v991 = vpop.permute.xlu0 %990
          %992 = vrot.lane.b32.xlu0 %v876, 88
          %v993 = vpop.permute.xlu0 %992
          %v995 = vsel %vm880, %v991, 0
          %v998 = vsel %vm880, %v993, 0
          %1000 = vmatprep.subr.bf16.mxu0 0
          %1001 = vmatpush1.bf16.xpose.msra.mxu0 0
          %1002 = vmatprep.subr.bf16.mxu0 0
          %1003 = vmatpush1.bf16.xpose.msra.mxu0 0
          %1004 = vmatprep.subr.bf16.mxu0 0
          %1005 = vmatpush1.bf16.xpose.msra.mxu0 0
          %1006 = vmatprep.subr.bf16.mxu0 0
          %1007 = vmatpush1.bf16.xpose.msra.mxu0 0
          %1008 = vmatprep.subr.bf16.mxu0 0
          %1009 = vmatpush1.bf16.xpose.msra.mxu0 0
          %1010 = vmatprep.subr.bf16.mxu0 0
          %1011 = vmatpush1.bf16.xpose.msra.mxu0 0
          %1012 = vmatprep.subr.bf16.mxu0 0
          %1013 = vmatpush1.bf16.xpose.msra.mxu0 0
          %1014 = vmatprep.subr.bf16.mxu0 0
          %1015 = vmatpush1.bf16.xpose.msra.mxu0 %v998
          %1016 = vmatprep.subr.bf16.mxu0 0
          %1017 = vmatpush2.bf16.xpose.msra.mxu0 0
          %1018 = vmatprep.subr.bf16.mxu0 0
          %1019 = vmatpush2.bf16.xpose.msra.mxu0 0
          %1020 = vmatprep.subr.bf16.mxu0 0
          %1021 = vmatpush2.bf16.xpose.msra.mxu0 0
          %1022 = vmatprep.subr.bf16.mxu0 0
          %1023 = vmatpush2.bf16.xpose.msra.mxu0 0
          %1024 = vmatprep.subr.bf16.mxu0 0
          %1025 = vmatpush2.bf16.xpose.msra.mxu0 0
          %1026 = vmatprep.subr.bf16.mxu0 0
          %1027 = vmatpush2.bf16.xpose.msra.mxu0 0
          %1028 = vmatprep.subr.bf16.mxu0 0
          %1029 = vmatpush2.bf16.xpose.msra.mxu0 0
          %1030 = vmatprep.subr.bf16.mxu0 0
          %1031 = vmatpush2.bf16.xpose.msra.mxu0 0
          %1032 = vmatprep.mubr.bf16.mxu0 0
          %1033 = vmatmul.mubr.bf16.gmra.mxu0 %v995
          %v1034 = vpop.f32.mrf.mxu0
          %v1035 = vadd.f32 0.0, %v1034
          %v1036 = vpop.f32.mrf.mxu0
          %v1037 = vpop.f32.mrf.mxu0
          %v1038 = vpop.f32.mrf.mxu0
          %1039 = vdwg.mxu0
          %v1040 = vmul.f32 %v1035, 0.35355338
          %v1041 = vsel %vm880, %v1040, -inf
          %1042 = vmax.xlane.f32.xlu0 %v1041
          %v1043 = vpop.xlane.xlu0 %1042
          %v1044 = vsub.f32 %v1040, %v1043
          %v1045 = vmul.f32 %v1044, 1.442695
          %v1046 = vpow.pop %v1045
          %v1047 = vsel %vm880, %v1046, 0.0
          %1048 = vadd.xlane.f32.xlu0 %v1047
          %v1049 = vpop.xlane.xlu0 %1048
          %v1050 = vrcp.pop %v1049
          %v1051 = vmul.f32 %v1046, %v1050
          %v1052 = vpack.c.bf16 %v1051, %v1051
          %1053 = vrot.lane.b32.xlu0 %v876, 56
          %v1054 = vpop.permute.xlu0 %1053
          %v1056 = vsel %vm880, %v1052, 0
          %v1059 = vsel %vm945, %v1054, 0
          %1061 = vmatprep.subr.bf16.mxu0 0
          %1062 = vmatpush1.bf16.msra.mxu0 0
          %1063 = vmatprep.subr.bf16.mxu0 0
          %1064 = vmatpush1.bf16.msra.mxu0 0
          %1065 = vmatprep.subr.bf16.mxu0 0
          %1066 = vmatpush1.bf16.msra.mxu0 0
          %1067 = vmatprep.subr.bf16.mxu0 0
          %1068 = vmatpush1.bf16.msra.mxu0 0
          %1069 = vmatprep.subr.bf16.mxu0 0
          %1070 = vmatpush1.bf16.msra.mxu0 0
          %1071 = vmatprep.subr.bf16.mxu0 0
          %1072 = vmatpush1.bf16.msra.mxu0 0
          %1073 = vmatprep.subr.bf16.mxu0 0
          %1074 = vmatpush1.bf16.msra.mxu0 0
          %1075 = vmatprep.subr.bf16.mxu0 0
          %1076 = vmatpush1.bf16.msra.mxu0 %v1059
          %1077 = vmatprep.subr.bf16.mxu0 0
          %1078 = vmatpush2.bf16.msra.mxu0 0
          %1079 = vmatprep.subr.bf16.mxu0 0
          %1080 = vmatpush2.bf16.msra.mxu0 0
          %1081 = vmatprep.subr.bf16.mxu0 0
          %1082 = vmatpush2.bf16.msra.mxu0 0
          %1083 = vmatprep.subr.bf16.mxu0 0
          %1084 = vmatpush2.bf16.msra.mxu0 0
          %1085 = vmatprep.subr.bf16.mxu0 0
          %1086 = vmatpush2.bf16.msra.mxu0 0
          %1087 = vmatprep.subr.bf16.mxu0 0
          %1088 = vmatpush2.bf16.msra.mxu0 0
          %1089 = vmatprep.subr.bf16.mxu0 0
          %1090 = vmatpush2.bf16.msra.mxu0 0
          %1091 = vmatprep.subr.bf16.mxu0 0
          %1092 = vmatpush2.bf16.msra.mxu0 0
          %1093 = vmatprep.mubr.bf16.mxu0 0
          %1094 = vmatmul.mubr.bf16.gmra.mxu0 %v1056
          %v1095 = vpop.f32.mrf.mxu0
          %v1096 = vadd.f32 0.0, %v1095
          %v1097 = vpop.f32.mrf.mxu0
          %v1098 = vpop.f32.mrf.mxu0
          %v1099 = vpop.f32.mrf.mxu0
          %1100 = vdwg.mxu0
          %v1101 = vpack.c.bf16 %v1096, %v1096
          %v1103 = vsel %vm880, %v1101, 0
          %v1106 = vsel %vm945, %v873, 0
          %1108 = vmatprep.subr.bf16.mxu0 0
          %1109 = vmatpush1.bf16.msra.mxu0 0
          %1110 = vmatprep.subr.bf16.mxu0 0
          %1111 = vmatpush1.bf16.msra.mxu0 0
          %1112 = vmatprep.subr.bf16.mxu0 0
          %1113 = vmatpush1.bf16.msra.mxu0 0
          %1114 = vmatprep.subr.bf16.mxu0 0
          %1115 = vmatpush1.bf16.msra.mxu0 0
          %1116 = vmatprep.subr.bf16.mxu0 0
          %1117 = vmatpush1.bf16.msra.mxu0 0
          %1118 = vmatprep.subr.bf16.mxu0 0
          %1119 = vmatpush1.bf16.msra.mxu0 0
          %1120 = vmatprep.subr.bf16.mxu0 0
          %1121 = vmatpush1.bf16.msra.mxu0 0
          %1122 = vmatprep.subr.bf16.mxu0 0
          %1123 = vmatpush1.bf16.msra.mxu0 %v1106
          %1124 = vmatprep.subr.bf16.mxu0 0
          %1125 = vmatpush2.bf16.msra.mxu0 0
          %1126 = vmatprep.subr.bf16.mxu0 0
          %1127 = vmatpush2.bf16.msra.mxu0 0
          %1128 = vmatprep.subr.bf16.mxu0 0
          %1129 = vmatpush2.bf16.msra.mxu0 0
          %1130 = vmatprep.subr.bf16.mxu0 0
          %1131 = vmatpush2.bf16.msra.mxu0 0
          %1132 = vmatprep.subr.bf16.mxu0 0
          %1133 = vmatpush2.bf16.msra.mxu0 0
          %1134 = vmatprep.subr.bf16.mxu0 0
          %1135 = vmatpush2.bf16.msra.mxu0 0
          %1136 = vmatprep.subr.bf16.mxu0 0
          %1137 = vmatpush2.bf16.msra.mxu0 0
          %1138 = vmatprep.subr.bf16.mxu0 0
          %1139 = vmatpush2.bf16.msra.mxu0 0
          %1140 = vmatprep.mubr.bf16.mxu0 0
          %1141 = vmatmul.mubr.bf16.gmra.mxu0 %v1103
          %v1142 = vpop.f32.mrf.mxu0
          %v1143 = vadd.f32 0.0, %v1142
          %v1144 = vpop.f32.mrf.mxu0
          %v1145 = vpop.f32.mrf.mxu0
          %v1146 = vpop.f32.mrf.mxu0
          %1147 = vdwg.mxu0
          %v1149 = vsel %vm880, %v989, 0
          %v1152 = vsel %vm945, %v872, 0
          %1154 = vmatprep.subr.bf16.mxu0 0
          %1155 = vmatpush1.bf16.msra.mxu0 0
          %1156 = vmatprep.subr.bf16.mxu0 0
          %1157 = vmatpush1.bf16.msra.mxu0 0
          %1158 = vmatprep.subr.bf16.mxu0 0
          %1159 = vmatpush1.bf16.msra.mxu0 0
          %1160 = vmatprep.subr.bf16.mxu0 0
          %1161 = vmatpush1.bf16.msra.mxu0 0
          %1162 = vmatprep.subr.bf16.mxu0 0
          %1163 = vmatpush1.bf16.msra.mxu0 0
          %1164 = vmatprep.subr.bf16.mxu0 0
          %1165 = vmatpush1.bf16.msra.mxu0 0
          %1166 = vmatprep.subr.bf16.mxu0 0
          %1167 = vmatpush1.bf16.msra.mxu0 0
          %1168 = vmatprep.subr.bf16.mxu0 0
          %1169 = vmatpush1.bf16.msra.mxu0 %v1152
          %1170 = vmatprep.subr.bf16.mxu0 0
          %1171 = vmatpush2.bf16.msra.mxu0 0
          %1172 = vmatprep.subr.bf16.mxu0 0
          %1173 = vmatpush2.bf16.msra.mxu0 0
          %1174 = vmatprep.subr.bf16.mxu0 0
          %1175 = vmatpush2.bf16.msra.mxu0 0
          %1176 = vmatprep.subr.bf16.mxu0 0
          %1177 = vmatpush2.bf16.msra.mxu0 0
          %1178 = vmatprep.subr.bf16.mxu0 0
          %1179 = vmatpush2.bf16.msra.mxu0 0
          %1180 = vmatprep.subr.bf16.mxu0 0
          %1181 = vmatpush2.bf16.msra.mxu0 0
          %1182 = vmatprep.subr.bf16.mxu0 0
          %1183 = vmatpush2.bf16.msra.mxu0 0
          %1184 = vmatprep.subr.bf16.mxu0 0
          %1185 = vmatpush2.bf16.msra.mxu0 0
          %1186 = vmatprep.mubr.bf16.mxu0 0
          %1187 = vmatmul.mubr.bf16.gmra.mxu0 %v1149
          %v1188 = vpop.f32.mrf.mxu0
          %v1189 = vadd.f32 %v1143, %v1188
          %v1190 = vpop.f32.mrf.mxu0
          %v1191 = vpop.f32.mrf.mxu0
          %v1192 = vpop.f32.mrf.mxu0
          %1193 = vdwg.mxu0
          %1194 = vrot.lane.b32.xlu0 %v876, 112
          %v1195 = vpop.permute.xlu0 %1194
          %1196 = vrot.lane.b32.xlu0 %v876, 80
          %v1197 = vpop.permute.xlu0 %1196
          %v1199 = vsel %vm880, %v1195, 0
          %v1202 = vsel %vm880, %v1197, 0
          %1204 = vmatprep.subr.bf16.mxu0 0
          %1205 = vmatpush1.bf16.xpose.msra.mxu0 0
          %1206 = vmatprep.subr.bf16.mxu0 0
          %1207 = vmatpush1.bf16.xpose.msra.mxu0 0
          %1208 = vmatprep.subr.bf16.mxu0 0
          %1209 = vmatpush1.bf16.xpose.msra.mxu0 0
          %1210 = vmatprep.subr.bf16.mxu0 0
          %1211 = vmatpush1.bf16.xpose.msra.mxu0 0
          %1212 = vmatprep.subr.bf16.mxu0 0
          %1213 = vmatpush1.bf16.xpose.msra.mxu0 0
          %1214 = vmatprep.subr.bf16.mxu0 0
          %1215 = vmatpush1.bf16.xpose.msra.mxu0 0
          %1216 = vmatprep.subr.bf16.mxu0 0
          %1217 = vmatpush1.bf16.xpose.msra.mxu0 0
          %1218 = vmatprep.subr.bf16.mxu0 0
          %1219 = vmatpush1.bf16.xpose.msra.mxu0 %v1202
          %1220 = vmatprep.subr.bf16.mxu0 0
          %1221 = vmatpush2.bf16.xpose.msra.mxu0 0
          %1222 = vmatprep.subr.bf16.mxu0 0
          %1223 = vmatpush2.bf16.xpose.msra.mxu0 0
          %1224 = vmatprep.subr.bf16.mxu0 0
          %1225 = vmatpush2.bf16.xpose.msra.mxu0 0
          %1226 = vmatprep.subr.bf16.mxu0 0
          %1227 = vmatpush2.bf16.xpose.msra.mxu0 0
          %1228 = vmatprep.subr.bf16.mxu0 0
          %1229 = vmatpush2.bf16.xpose.msra.mxu0 0
          %1230 = vmatprep.subr.bf16.mxu0 0
          %1231 = vmatpush2.bf16.xpose.msra.mxu0 0
          %1232 = vmatprep.subr.bf16.mxu0 0
          %1233 = vmatpush2.bf16.xpose.msra.mxu0 0
          %1234 = vmatprep.subr.bf16.mxu0 0
          %1235 = vmatpush2.bf16.xpose.msra.mxu0 0
          %1236 = vmatprep.mubr.bf16.mxu0 0
          %1237 = vmatmul.mubr.bf16.gmra.mxu0 %v1199
          %v1238 = vpop.f32.mrf.mxu0
          %v1239 = vadd.f32 0.0, %v1238
          %v1240 = vpop.f32.mrf.mxu0
          %v1241 = vpop.f32.mrf.mxu0
          %v1242 = vpop.f32.mrf.mxu0
          %1243 = vdwg.mxu0
          %v1244 = vmul.f32 %v1239, 0.35355338
          %v1245 = vsel %vm880, %v1244, -inf
          %1246 = vmax.xlane.f32.xlu0 %v1245
          %v1247 = vpop.xlane.xlu0 %1246
          %v1248 = vsub.f32 %v1244, %v1247
          %v1249 = vmul.f32 %v1248, 1.442695
          %v1250 = vpow.pop %v1249
          %v1251 = vsel %vm880, %v1250, 0.0
          %1252 = vadd.xlane.f32.xlu0 %v1251
          %v1253 = vpop.xlane.xlu0 %1252
          %v1254 = vrcp.pop %v1253
          %v1255 = vmul.f32 %v1250, %v1254
          %v1256 = vpack.c.bf16 %v1255, %v1255
          %1257 = vrot.lane.b32.xlu0 %v876, 48
          %v1258 = vpop.permute.xlu0 %1257
          %v1260 = vsel %vm880, %v1256, 0
          %v1263 = vsel %vm945, %v1258, 0
          %1265 = vmatprep.subr.bf16.mxu0 0
          %1266 = vmatpush1.bf16.msra.mxu0 0
          %1267 = vmatprep.subr.bf16.mxu0 0
          %1268 = vmatpush1.bf16.msra.mxu0 0
          %1269 = vmatprep.subr.bf16.mxu0 0
          %1270 = vmatpush1.bf16.msra.mxu0 0
          %1271 = vmatprep.subr.bf16.mxu0 0
          %1272 = vmatpush1.bf16.msra.mxu0 0
          %1273 = vmatprep.subr.bf16.mxu0 0
          %1274 = vmatpush1.bf16.msra.mxu0 0
          %1275 = vmatprep.subr.bf16.mxu0 0
          %1276 = vmatpush1.bf16.msra.mxu0 0
          %1277 = vmatprep.subr.bf16.mxu0 0
          %1278 = vmatpush1.bf16.msra.mxu0 0
          %1279 = vmatprep.subr.bf16.mxu0 0
          %1280 = vmatpush1.bf16.msra.mxu0 %v1263
          %1281 = vmatprep.subr.bf16.mxu0 0
          %1282 = vmatpush2.bf16.msra.mxu0 0
          %1283 = vmatprep.subr.bf16.mxu0 0
          %1284 = vmatpush2.bf16.msra.mxu0 0
          %1285 = vmatprep.subr.bf16.mxu0 0
          %1286 = vmatpush2.bf16.msra.mxu0 0
          %1287 = vmatprep.subr.bf16.mxu0 0
          %1288 = vmatpush2.bf16.msra.mxu0 0
          %1289 = vmatprep.subr.bf16.mxu0 0
          %1290 = vmatpush2.bf16.msra.mxu0 0
          %1291 = vmatprep.subr.bf16.mxu0 0
          %1292 = vmatpush2.bf16.msra.mxu0 0
          %1293 = vmatprep.subr.bf16.mxu0 0
          %1294 = vmatpush2.bf16.msra.mxu0 0
          %1295 = vmatprep.subr.bf16.mxu0 0
          %1296 = vmatpush2.bf16.msra.mxu0 0
          %1297 = vmatprep.mubr.bf16.mxu0 0
          %1298 = vmatmul.mubr.bf16.gmra.mxu0 %v1260
          %v1299 = vpop.f32.mrf.mxu0
          %v1300 = vadd.f32 0.0, %v1299
          %v1301 = vpop.f32.mrf.mxu0
          %v1302 = vpop.f32.mrf.mxu0
          %v1303 = vpop.f32.mrf.mxu0
          %1304 = vdwg.mxu0
          %v1305 = vpack.c.bf16 %v1300, %v1300
          %v1307 = vsel %vm880, %v1305, 0
          %v1310 = vsel %vm945, %v874, 0
          %1312 = vmatprep.subr.bf16.mxu0 0
          %1313 = vmatpush1.bf16.msra.mxu0 0
          %1314 = vmatprep.subr.bf16.mxu0 0
          %1315 = vmatpush1.bf16.msra.mxu0 0
          %1316 = vmatprep.subr.bf16.mxu0 0
          %1317 = vmatpush1.bf16.msra.mxu0 0
          %1318 = vmatprep.subr.bf16.mxu0 0
          %1319 = vmatpush1.bf16.msra.mxu0 0
          %1320 = vmatprep.subr.bf16.mxu0 0
          %1321 = vmatpush1.bf16.msra.mxu0 0
          %1322 = vmatprep.subr.bf16.mxu0 0
          %1323 = vmatpush1.bf16.msra.mxu0 0
          %1324 = vmatprep.subr.bf16.mxu0 0
          %1325 = vmatpush1.bf16.msra.mxu0 0
          %1326 = vmatprep.subr.bf16.mxu0 0
          %1327 = vmatpush1.bf16.msra.mxu0 %v1310
          %1328 = vmatprep.subr.bf16.mxu0 0
          %1329 = vmatpush2.bf16.msra.mxu0 0
          %1330 = vmatprep.subr.bf16.mxu0 0
          %1331 = vmatpush2.bf16.msra.mxu0 0
          %1332 = vmatprep.subr.bf16.mxu0 0
          %1333 = vmatpush2.bf16.msra.mxu0 0
          %1334 = vmatprep.subr.bf16.mxu0 0
          %1335 = vmatpush2.bf16.msra.mxu0 0
          %1336 = vmatprep.subr.bf16.mxu0 0
          %1337 = vmatpush2.bf16.msra.mxu0 0
          %1338 = vmatprep.subr.bf16.mxu0 0
          %1339 = vmatpush2.bf16.msra.mxu0 0
          %1340 = vmatprep.subr.bf16.mxu0 0
          %1341 = vmatpush2.bf16.msra.mxu0 0
          %1342 = vmatprep.subr.bf16.mxu0 0
          %1343 = vmatpush2.bf16.msra.mxu0 0
          %1344 = vmatprep.mubr.bf16.mxu0 0
          %1345 = vmatmul.mubr.bf16.gmra.mxu0 %v1307
          %v1346 = vpop.f32.mrf.mxu0
          %v1347 = vadd.f32 0.0, %v1346
          %v1348 = vpop.f32.mrf.mxu0
          %v1349 = vpop.f32.mrf.mxu0
          %v1350 = vpop.f32.mrf.mxu0
          %1351 = vdwg.mxu0
          %v1352 = vadd.f32 %v1189, %v1347
          %1353 = vrot.lane.b32.xlu0 %v876, 104
          %v1354 = vpop.permute.xlu0 %1353
          %1355 = vrot.lane.b32.xlu0 %v876, 72
          %v1356 = vpop.permute.xlu0 %1355
          %v1358 = vsel %vm880, %v1354, 0
          %v1361 = vsel %vm880, %v1356, 0
          %1363 = vmatprep.subr.bf16.mxu0 0
          %1364 = vmatpush1.bf16.xpose.msra.mxu0 0
          %1365 = vmatprep.subr.bf16.mxu0 0
          %1366 = vmatpush1.bf16.xpose.msra.mxu0 0
          %1367 = vmatprep.subr.bf16.mxu0 0
          %1368 = vmatpush1.bf16.xpose.msra.mxu0 0
          %1369 = vmatprep.subr.bf16.mxu0 0
          %1370 = vmatpush1.bf16.xpose.msra.mxu0 0
          %1371 = vmatprep.subr.bf16.mxu0 0
          %1372 = vmatpush1.bf16.xpose.msra.mxu0 0
          %1373 = vmatprep.subr.bf16.mxu0 0
          %1374 = vmatpush1.bf16.xpose.msra.mxu0 0
          %1375 = vmatprep.subr.bf16.mxu0 0
          %1376 = vmatpush1.bf16.xpose.msra.mxu0 0
          %1377 = vmatprep.subr.bf16.mxu0 0
          %1378 = vmatpush1.bf16.xpose.msra.mxu0 %v1361
          %1379 = vmatprep.subr.bf16.mxu0 0
          %1380 = vmatpush2.bf16.xpose.msra.mxu0 0
          %1381 = vmatprep.subr.bf16.mxu0 0
          %1382 = vmatpush2.bf16.xpose.msra.mxu0 0
          %1383 = vmatprep.subr.bf16.mxu0 0
          %1384 = vmatpush2.bf16.xpose.msra.mxu0 0
          %1385 = vmatprep.subr.bf16.mxu0 0
          %1386 = vmatpush2.bf16.xpose.msra.mxu0 0
          %1387 = vmatprep.subr.bf16.mxu0 0
          %1388 = vmatpush2.bf16.xpose.msra.mxu0 0
          %1389 = vmatprep.subr.bf16.mxu0 0
          %1390 = vmatpush2.bf16.xpose.msra.mxu0 0
          %1391 = vmatprep.subr.bf16.mxu0 0
          %1392 = vmatpush2.bf16.xpose.msra.mxu0 0
          %1393 = vmatprep.subr.bf16.mxu0 0
          %1394 = vmatpush2.bf16.xpose.msra.mxu0 0
          %1395 = vmatprep.mubr.bf16.mxu0 0
          %1396 = vmatmul.mubr.bf16.gmra.mxu0 %v1358
          %v1397 = vpop.f32.mrf.mxu0
          %v1398 = vadd.f32 0.0, %v1397
          %v1399 = vpop.f32.mrf.mxu0
          %v1400 = vpop.f32.mrf.mxu0
          %v1401 = vpop.f32.mrf.mxu0
          %1402 = vdwg.mxu0
          %v1403 = vmul.f32 %v1398, 0.35355338
          %v1404 = vsel %vm880, %v1403, -inf
          %1405 = vmax.xlane.f32.xlu0 %v1404
          %v1406 = vpop.xlane.xlu0 %1405
          %v1407 = vsub.f32 %v1403, %v1406
          %v1408 = vmul.f32 %v1407, 1.442695
          %v1409 = vpow.pop %v1408
          %v1410 = vsel %vm880, %v1409, 0.0
          %1411 = vadd.xlane.f32.xlu0 %v1410
          %v1412 = vpop.xlane.xlu0 %1411
          %v1413 = vrcp.pop %v1412
          %v1414 = vmul.f32 %v1409, %v1413
          %v1415 = vpack.c.bf16 %v1414, %v1414
          %1416 = vrot.lane.b32.xlu0 %v876, 40
          %v1417 = vpop.permute.xlu0 %1416
          %v1419 = vsel %vm880, %v1415, 0
          %v1422 = vsel %vm945, %v1417, 0
          %1424 = vmatprep.subr.bf16.mxu0 0
          %1425 = vmatpush1.bf16.msra.mxu0 0
          %1426 = vmatprep.subr.bf16.mxu0 0
          %1427 = vmatpush1.bf16.msra.mxu0 0
          %1428 = vmatprep.subr.bf16.mxu0 0
          %1429 = vmatpush1.bf16.msra.mxu0 0
          %1430 = vmatprep.subr.bf16.mxu0 0
          %1431 = vmatpush1.bf16.msra.mxu0 0
          %1432 = vmatprep.subr.bf16.mxu0 0
          %1433 = vmatpush1.bf16.msra.mxu0 0
          %1434 = vmatprep.subr.bf16.mxu0 0
          %1435 = vmatpush1.bf16.msra.mxu0 0
          %1436 = vmatprep.subr.bf16.mxu0 0
          %1437 = vmatpush1.bf16.msra.mxu0 0
          %1438 = vmatprep.subr.bf16.mxu0 0
          %1439 = vmatpush1.bf16.msra.mxu0 %v1422
          %1440 = vmatprep.subr.bf16.mxu0 0
          %1441 = vmatpush2.bf16.msra.mxu0 0
          %1442 = vmatprep.subr.bf16.mxu0 0
          %1443 = vmatpush2.bf16.msra.mxu0 0
          %1444 = vmatprep.subr.bf16.mxu0 0
          %1445 = vmatpush2.bf16.msra.mxu0 0
          %1446 = vmatprep.subr.bf16.mxu0 0
          %1447 = vmatpush2.bf16.msra.mxu0 0
          %1448 = vmatprep.subr.bf16.mxu0 0
          %1449 = vmatpush2.bf16.msra.mxu0 0
          %1450 = vmatprep.subr.bf16.mxu0 0
          %1451 = vmatpush2.bf16.msra.mxu0 0
          %1452 = vmatprep.subr.bf16.mxu0 0
          %1453 = vmatpush2.bf16.msra.mxu0 0
          %1454 = vmatprep.subr.bf16.mxu0 0
          %1455 = vmatpush2.bf16.msra.mxu0 0
          %1456 = vmatprep.mubr.bf16.mxu0 0
          %1457 = vmatmul.mubr.bf16.gmra.mxu0 %v1419
          %v1458 = vpop.f32.mrf.mxu0
          %v1459 = vadd.f32 0.0, %v1458
          %v1460 = vpop.f32.mrf.mxu0
          %v1461 = vpop.f32.mrf.mxu0
          %v1462 = vpop.f32.mrf.mxu0
          %1463 = vdwg.mxu0
          %v1464 = vpack.c.bf16 %v1459, %v1459
          %v1466 = vsel %vm880, %v1464, 0
          %v1469 = vsel %vm945, %v875, 0
          %1471 = vmatprep.subr.bf16.mxu0 0
          %1472 = vmatpush1.bf16.msra.mxu0 0
          %1473 = vmatprep.subr.bf16.mxu0 0
          %1474 = vmatpush1.bf16.msra.mxu0 0
          %1475 = vmatprep.subr.bf16.mxu0 0
          %1476 = vmatpush1.bf16.msra.mxu0 0
          %1477 = vmatprep.subr.bf16.mxu0 0
          %1478 = vmatpush1.bf16.msra.mxu0 0
          %1479 = vmatprep.subr.bf16.mxu0 0
          %1480 = vmatpush1.bf16.msra.mxu0 0
          %1481 = vmatprep.subr.bf16.mxu0 0
          %1482 = vmatpush1.bf16.msra.mxu0 0
          %1483 = vmatprep.subr.bf16.mxu0 0
          %1484 = vmatpush1.bf16.msra.mxu0 0
          %1485 = vmatprep.subr.bf16.mxu0 0
          %1486 = vmatpush1.bf16.msra.mxu0 %v1469
          %1487 = vmatprep.subr.bf16.mxu0 0
          %1488 = vmatpush2.bf16.msra.mxu0 0
          %1489 = vmatprep.subr.bf16.mxu0 0
          %1490 = vmatpush2.bf16.msra.mxu0 0
          %1491 = vmatprep.subr.bf16.mxu0 0
          %1492 = vmatpush2.bf16.msra.mxu0 0
          %1493 = vmatprep.subr.bf16.mxu0 0
          %1494 = vmatpush2.bf16.msra.mxu0 0
          %1495 = vmatprep.subr.bf16.mxu0 0
          %1496 = vmatpush2.bf16.msra.mxu0 0
          %1497 = vmatprep.subr.bf16.mxu0 0
          %1498 = vmatpush2.bf16.msra.mxu0 0
          %1499 = vmatprep.subr.bf16.mxu0 0
          %1500 = vmatpush2.bf16.msra.mxu0 0
          %1501 = vmatprep.subr.bf16.mxu0 0
          %1502 = vmatpush2.bf16.msra.mxu0 0
          %1503 = vmatprep.mubr.bf16.mxu0 0
          %1504 = vmatmul.mubr.bf16.gmra.mxu0 %v1466
          %v1505 = vpop.f32.mrf.mxu0
          %v1506 = vadd.f32 0.0, %v1505
          %v1507 = vpop.f32.mrf.mxu0
          %v1508 = vpop.f32.mrf.mxu0
          %v1509 = vpop.f32.mrf.mxu0
          %1510 = vdwg.mxu0
          %v1511 = vadd.f32 %v1352, %v1506
          %v1512 = vld [vmem:[%s757] sm:$0x1]
          %v1514 = vlaneseq
          %v1515 = vshrl.u32 %v1514, 7
          %v1516 = vsub.s32 0, %v1515
          %v1517 = vrot.slane %v1512, %v1516
          %v1519 = vadd.f32 %v1511, %v1517
          %v1520 = vadd.f32 %v1519, %v803
          %v1521 = vld [vmem:[%s760] sm:$0x1]
          %v1522 = vld [vmem:[%s763] sm:$0x1]
          %v1523 = vsel %vm828, %v1520, 0.0
          %1524 = vadd.xlane.f32.xlu0 %v1523
          %v1525 = vpop.xlane.xlu0 %1524
          %v1526 = vrcp.pop 32.0
          %v1527 = vmul.f32 %v1525, %v1526
          %v1528 = vsub.f32 %v1520, %v1527
          %v1529 = vmul.f32 %v1528, %v1528
          %v1530 = vsel %vm828, %v1529, 0.0
          %1531 = vadd.xlane.f32.xlu0 %v1530
          %v1532 = vpop.xlane.xlu0 %1531
          %v1533 = vmul.f32 %v1532, %v1526
          %v1534 = vadd.f32 %v1533, 1e-05
          %v1535 = vrsqrt.pop %v1534
          %v1536 = vmul.f32 %v1528, %v1535
          %v1538 = vlaneseq
          %v1539 = vshrl.u32 %v1538, 7
          %v1540 = vsub.s32 0, %v1539
          %v1541 = vrot.slane %v1521, %v1540
          %v1543 = vmul.f32 %v1536, %v1541
          %v1545 = vlaneseq
          %v1546 = vshrl.u32 %v1545, 7
          %v1547 = vsub.s32 0, %v1546
          %v1548 = vrot.slane %v1522, %v1547
          %v1550 = vadd.f32 %v1543, %v1548
          %1551 = vst.msk [vmem:[#allocation2] sm:$0xff] %vm828, %v1550
        $region129: #{tpu_custom_call.1} parent=116 // pred_fallthru
          _
        %v1552 = vld [vmem:[#allocation2] sm:$0xff]
        %v1553 = vpack.c.bf16 %v1552, %v1552
        %v1554 = vld [vmem:[%s642] sm:$0xf]
        %v1555 = vld [vmem:[%s642 + $0x4] sm:$0xf]
        %v1556 = vld [vmem:[%s642 + $0x8] sm:$0xf]
        %v1557 = vld [vmem:[%s642 + $0xc] sm:$0xf]
        %v1558 = vld [vmem:[%s770] sm:$0x1]
        %v1560 = vlaneseq
        %v1561 = vshrl.u32 %v1560, 7
        %v1562 = vsub.s32 0, %v1561
        %v1563 = vrot.slane %v1558, %v1562
        %v1569 = vunpack.c.l.b16 %v1554
        %v1570 = vunpack.c.l.b16 %v1555
        %v1571 = vunpack.c.l.b16 %v1556
        %v1572 = vunpack.c.l.b16 %v1557
        %v1573 = vpack.c.b16 %v1570, %v1569
        %v1574 = vpack.c.b16 %v1572, %v1571
        %vm1577 = vcmask 261120
        %v1579 = vsel %vm1577, %v1553, 0
        %1581 = vmatprep.subr.bf16.mxu0 0
        %1582 = vmatpush1.bf16.msra.mxu0 0
        %1583 = vmatprep.subr.bf16.mxu0 0
        %1584 = vmatpush1.bf16.msra.mxu0 0
        %1585 = vmatprep.subr.bf16.mxu0 0
        %1586 = vmatpush1.bf16.msra.mxu0 0
        %1587 = vmatprep.subr.bf16.mxu0 0
        %1588 = vmatpush1.bf16.msra.mxu0 0
        %1589 = vmatprep.subr.bf16.mxu0 0
        %1590 = vmatpush1.bf16.msra.mxu0 0
        %1591 = vmatprep.subr.bf16.mxu0 0
        %1592 = vmatpush1.bf16.msra.mxu0 0
        %1593 = vmatprep.subr.bf16.mxu0 0
        %1594 = vmatpush1.bf16.msra.mxu0 %v1574
        %1595 = vmatprep.subr.bf16.mxu0 0
        %1596 = vmatpush1.bf16.msra.mxu0 %v1573
        %1597 = vmatprep.subr.bf16.mxu0 0
        %1598 = vmatpush2.bf16.msra.mxu0 0
        %1599 = vmatprep.subr.bf16.mxu0 0
        %1600 = vmatpush2.bf16.msra.mxu0 0
        %1601 = vmatprep.subr.bf16.mxu0 0
        %1602 = vmatpush2.bf16.msra.mxu0 0
        %1603 = vmatprep.subr.bf16.mxu0 0
        %1604 = vmatpush2.bf16.msra.mxu0 0
        %1605 = vmatprep.subr.bf16.mxu0 0
        %1606 = vmatpush2.bf16.msra.mxu0 0
        %1607 = vmatprep.subr.bf16.mxu0 0
        %1608 = vmatpush2.bf16.msra.mxu0 0
        %1609 = vmatprep.subr.bf16.mxu0 0
        %1610 = vmatpush2.bf16.msra.mxu0 0
        %1611 = vmatprep.subr.bf16.mxu0 0
        %1612 = vmatpush2.bf16.msra.mxu0 0
        %1613 = vmatprep.mubr.bf16.mxu0 0
        %1614 = vmatmul.mubr.bf16.gmra.mxu0 %v1579
        %v1615 = vpop.f32.mrf.mxu0
        %v1616 = vadd.f32 %v1563, %v1615
        %v1617 = vpop.f32.mrf.mxu0
        %v1618 = vpop.f32.mrf.mxu0
        %v1619 = vpop.f32.mrf.mxu0
        %1620 = vdwg.mxu0
        %v1621 = vmax.f32 %v1616, 0.0
        %v1622 = vpack.c.bf16 %v1621, %v1621
        %v1623 = vld [vmem:[%s779] sm:$0xf]
        %v1624 = vld [vmem:[%s779 + $0x4] sm:$0xf]
        %v1625 = vld [vmem:[%s779 + $0x8] sm:$0xf]
        %v1626 = vld [vmem:[%s779 + $0xc] sm:$0xf]
        %v1627 = vld [vmem:[%s779 + $0x10] sm:$0xf]
        %v1628 = vld [vmem:[%s779 + $0x14] sm:$0xf]
        %v1629 = vld [vmem:[%s779 + $0x18] sm:$0xf]
        %v1630 = vld [vmem:[%s779 + $0x1c] sm:$0xf]
        %v1631 = vld [vmem:[%s779 + $0x20] sm:$0xf]
        %v1632 = vld [vmem:[%s779 + $0x24] sm:$0xf]
        %v1633 = vld [vmem:[%s779 + $0x28] sm:$0xf]
        %v1634 = vld [vmem:[%s779 + $0x2c] sm:$0xf]
        %v1635 = vld [vmem:[%s779 + $0x30] sm:$0xf]
        %v1636 = vld [vmem:[%s779 + $0x34] sm:$0xf]
        %v1637 = vld [vmem:[%s779 + $0x38] sm:$0xf]
        %v1638 = vld [vmem:[%s779 + $0x3c] sm:$0xf]
        %v1655 = vunpack.c.l.b16 %v1623
        %v1656 = vunpack.c.l.b16 %v1624
        %v1657 = vunpack.c.l.b16 %v1625
        %v1658 = vunpack.c.l.b16 %v1626
        %v1659 = vunpack.c.l.b16 %v1627
        %v1660 = vunpack.c.l.b16 %v1628
        %v1661 = vunpack.c.l.b16 %v1629
        %v1662 = vunpack.c.l.b16 %v1630
        %v1663 = vunpack.c.l.b16 %v1631
        %v1664 = vunpack.c.l.b16 %v1632
        %v1665 = vunpack.c.l.b16 %v1633
        %v1666 = vunpack.c.l.b16 %v1634
        %v1667 = vunpack.c.l.b16 %v1635
        %v1668 = vunpack.c.l.b16 %v1636
        %v1669 = vunpack.c.l.b16 %v1637
        %v1670 = vunpack.c.l.b16 %v1638
        %v1671 = vpack.c.b16 %v1656, %v1655
        %v1672 = vpack.c.b16 %v1658, %v1657
        %v1673 = vpack.c.b16 %v1660, %v1659
        %v1674 = vpack.c.b16 %v1662, %v1661
        %v1675 = vpack.c.b16 %v1664, %v1663
        %v1676 = vpack.c.b16 %v1666, %v1665
        %v1677 = vpack.c.b16 %v1668, %v1667
        %v1678 = vpack.c.b16 %v1670, %v1669
        %1687 = vmatprep.subr.bf16.mxu0 0
        %1688 = vmatpush1.bf16.msra.mxu0 %v1678
        %1689 = vmatprep.subr.bf16.mxu0 0
        %1690 = vmatpush1.bf16.msra.mxu0 %v1677
        %1691 = vmatprep.subr.bf16.mxu0 0
        %1692 = vmatpush1.bf16.msra.mxu0 %v1676
        %1693 = vmatprep.subr.bf16.mxu0 0
        %1694 = vmatpush1.bf16.msra.mxu0 %v1675
        %1695 = vmatprep.subr.bf16.mxu0 0
        %1696 = vmatpush1.bf16.msra.mxu0 %v1674
        %1697 = vmatprep.subr.bf16.mxu0 0
        %1698 = vmatpush1.bf16.msra.mxu0 %v1673
        %1699 = vmatprep.subr.bf16.mxu0 0
        %1700 = vmatpush1.bf16.msra.mxu0 %v1672
        %1701 = vmatprep.subr.bf16.mxu0 0
        %1702 = vmatpush1.bf16.msra.mxu0 %v1671
        %1703 = vmatprep.subr.bf16.mxu0 0
        %1704 = vmatpush2.bf16.msra.mxu0 0
        %1705 = vmatprep.subr.bf16.mxu0 0
        %1706 = vmatpush2.bf16.msra.mxu0 0
        %1707 = vmatprep.subr.bf16.mxu0 0
        %1708 = vmatpush2.bf16.msra.mxu0 0
        %1709 = vmatprep.subr.bf16.mxu0 0
        %1710 = vmatpush2.bf16.msra.mxu0 0
        %1711 = vmatprep.subr.bf16.mxu0 0
        %1712 = vmatpush2.bf16.msra.mxu0 0
        %1713 = vmatprep.subr.bf16.mxu0 0
        %1714 = vmatpush2.bf16.msra.mxu0 0
        %1715 = vmatprep.subr.bf16.mxu0 0
        %1716 = vmatpush2.bf16.msra.mxu0 0
        %1717 = vmatprep.subr.bf16.mxu0 0
        %1718 = vmatpush2.bf16.msra.mxu0 0
        %1719 = vmatprep.mubr.bf16.mxu0 0
        %1720 = vmatmul.mubr.bf16.gmra.mxu0 %v1622
        %v1721 = vpop.f32.mrf.mxu0
        %v1722 = vadd.f32 0.0, %v1721
        %v1723 = vpop.f32.mrf.mxu0
        %v1724 = vpop.f32.mrf.mxu0
        %v1725 = vpop.f32.mrf.mxu0
        %1726 = vdwg.mxu0
        // Predicated region
        $region130: #{tpu_custom_call.1} parent=116 // pred_check
          %p1727 = pneg %p792
        $region131: #{tpu_custom_call.1} parent=116 // pred_check_branch
          %1729 = sbr.rel (%p1727) target = $region133
        $region132: #{tpu_custom_call.1} parent=116 // pred_region
          %1730 = vst.msk [vmem:[#allocation3] sm:$0xff] %vm1577, %v1722
        $region133: #{tpu_custom_call.1} parent=116 // pred_fallthru
          _
        %p1731 = scmp.gt.s32.totalorder %s36, 0
        // Predicated region
        $region134: #{tpu_custom_call.1} parent=116 // pred_check
          %p1732 = pneg %p1731
        $region135: #{tpu_custom_call.1} parent=116 // pred_check_branch
          %1734 = sbr.rel (%p1732) target = $region137
        $region136: #{tpu_custom_call.1} parent=116 // pred_region
          %v1735 = vld [vmem:[#allocation3] sm:$0xff]
          %v1736 = vadd.f32 %v1735, %v1722
          %1737 = vst.msk [vmem:[#allocation3] sm:$0xff] %vm1577, %v1736
        $region137: #{tpu_custom_call.1} parent=116 // pred_fallthru
          _
        %p1738 = scmp.eq.s32.totalorder %s36, 1
        %p1739 = scmp.lt.s32.totalorder %s35, 1
        %p1740 = pnand %p1738, %p1739
        %p1741 = pneg %p1740
        // Predicated region
        $region138: #{tpu_custom_call.1} parent=116 // pred_check
          _
        $region139: #{tpu_custom_call.1} parent=116 // pred_check_branch
          %1743 = sbr.rel (%p1740) target = $region141
        $region140: #{tpu_custom_call.1} parent=116 // pred_region
          %v1744 = vld [vmem:[#allocation3] sm:$0xff]
          %v1745 = vld [vmem:[%s783] sm:$0x1]
          %v1747 = vlaneseq
          %v1748 = vshrl.u32 %v1747, 7
          %v1749 = vsub.s32 0, %v1748
          %v1750 = vrot.slane %v1745, %v1749
          %v1752 = vadd.f32 %v1744, %v1750
          %v1753 = vld [vmem:[#allocation2] sm:$0xff]
          %v1754 = vadd.f32 %v1752, %v1753
          %v1755 = vld [vmem:[%s786] sm:$0x1]
          %v1756 = vld [vmem:[%s789] sm:$0x1]
          %v1757 = vsel %vm1577, %v1754, 0.0
          %1758 = vadd.xlane.f32.xlu0 %v1757
          %v1759 = vpop.xlane.xlu0 %1758
          %v1760 = vrcp.pop 32.0
          %v1761 = vmul.f32 %v1759, %v1760
          %v1762 = vsub.f32 %v1754, %v1761
          %v1763 = vmul.f32 %v1762, %v1762
          %v1764 = vsel %vm1577, %v1763, 0.0
          %1765 = vadd.xlane.f32.xlu0 %v1764
          %v1766 = vpop.xlane.xlu0 %1765
          %v1767 = vmul.f32 %v1766, %v1760
          %v1768 = vadd.f32 %v1767, 1e-05
          %v1769 = vrsqrt.pop %v1768
          %v1770 = vmul.f32 %v1762, %v1769
          %v1772 = vlaneseq
          %v1773 = vshrl.u32 %v1772, 7
          %v1774 = vsub.s32 0, %v1773
          %v1775 = vrot.slane %v1755, %v1774
          %v1777 = vmul.f32 %v1770, %v1775
          %v1779 = vlaneseq
          %v1780 = vshrl.u32 %v1779, 7
          %v1781 = vsub.s32 0, %v1780
          %v1782 = vrot.slane %v1756, %v1781
          %v1784 = vadd.f32 %v1777, %v1782
          %1785 = vst.msk [vmem:[%s737] sm:$0xff] %vm1577, %v1784
        $region141: #{tpu_custom_call.1} parent=116 // pred_fallthru
          _
        %p1786 = scmp.eq.s32.totalorder %s35, 1
        %p1787 = pnand %p1738, %p1786
        %p1788 = pneg %p1787
        // Predicated region
        $region142: #{tpu_custom_call.1} parent=116 // pred_check
          _
        $region143: #{tpu_custom_call.1} parent=116 // pred_check_branch
          %1790 = sbr.rel (%p1787) target = $region145
        $region144: #{tpu_custom_call.1} parent=116 // pred_region
          %v1791 = vld [vmem:[#allocation3] sm:$0xff]
          %v1792 = vld [vmem:[%s783] sm:$0x1]
          %v1794 = vlaneseq
          %v1795 = vshrl.u32 %v1794, 7
          %v1796 = vsub.s32 0, %v1795
          %v1797 = vrot.slane %v1792, %v1796
          %v1799 = vadd.f32 %v1791, %v1797
          %v1800 = vld [vmem:[#allocation2] sm:$0xff]
          %v1801 = vadd.f32 %v1799, %v1800
          %v1802 = vld [vmem:[%s786] sm:$0x1]
          %v1803 = vld [vmem:[%s789] sm:$0x1]
          %v1804 = vsel %vm1577, %v1801, 0.0
          %1805 = vadd.xlane.f32.xlu0 %v1804
          %v1806 = vpop.xlane.xlu0 %1805
          %v1807 = vrcp.pop 32.0
          %v1808 = vmul.f32 %v1806, %v1807
          %v1809 = vsub.f32 %v1801, %v1808
          %v1810 = vmul.f32 %v1809, %v1809
          %v1811 = vsel %vm1577, %v1810, 0.0
          %1812 = vadd.xlane.f32.xlu0 %v1811
          %v1813 = vpop.xlane.xlu0 %1812
          %v1814 = vmul.f32 %v1813, %v1807
          %v1815 = vadd.f32 %v1814, 1e-05
          %v1816 = vrsqrt.pop %v1815
          %v1817 = vmul.f32 %v1809, %v1816
          %v1819 = vlaneseq
          %v1820 = vshrl.u32 %v1819, 7
          %v1821 = vsub.s32 0, %v1820
          %v1822 = vrot.slane %v1802, %v1821
          %v1824 = vmul.f32 %v1817, %v1822
          %v1826 = vlaneseq
          %v1827 = vshrl.u32 %v1826, 7
          %v1828 = vsub.s32 0, %v1827
          %v1829 = vrot.slane %v1803, %v1828
          %v1831 = vadd.f32 %v1824, %v1829
          %v1832 = vld [vmem:[%s13] sm:$0x1]
          %v1833 = vld [vmem:[%s14] sm:$0x1]
          %v1834 = vsel %vm1577, %v1831, 0.0
          %1835 = vadd.xlane.f32.xlu0 %v1834
          %v1836 = vpop.xlane.xlu0 %1835
          %v1837 = vmul.f32 %v1836, %v1807
          %v1838 = vsub.f32 %v1831, %v1837
          %v1839 = vmul.f32 %v1838, %v1838
          %v1840 = vsel %vm1577, %v1839, 0.0
          %1841 = vadd.xlane.f32.xlu0 %v1840
          %v1842 = vpop.xlane.xlu0 %1841
          %v1843 = vmul.f32 %v1842, %v1807
          %v1844 = vadd.f32 %v1843, 1e-05
          %v1845 = vrsqrt.pop %v1844
          %v1846 = vmul.f32 %v1838, %v1845
          %v1848 = vlaneseq
          %v1849 = vshrl.u32 %v1848, 7
          %v1850 = vsub.s32 0, %v1849
          %v1851 = vrot.slane %v1832, %v1850
          %v1853 = vmul.f32 %v1846, %v1851
          %v1855 = vlaneseq
          %v1856 = vshrl.u32 %v1855, 7
          %v1857 = vsub.s32 0, %v1856
          %v1858 = vrot.slane %v1833, %v1857
          %v1860 = vadd.f32 %v1853, %v1858
          %1861 = vst.msk [vmem:[%s737] sm:$0xff] %vm1577, %v1860
        $region145: #{tpu_custom_call.1} parent=116 // pred_fallthru
          _
        %s1862 = sand.u32 %s442, 1
        %s1863 = scalar_lea.sflag [#allocation6], %s1862
        %s1864 = sand.u32 %s442, 1
        %s1865 = smul.addr %s1864, 8
        %s1866 = scalar_lea.vmem [#allocation5], %s1865
        // Predicated region
        $region146: #{tpu_custom_call.1} parent=116 // pred_check
          %p1867 = pneg %p452
        $region147: #{tpu_custom_call.1} parent=116 // pred_check_branch
          %1869 = sbr.rel (%p1867) target = $region149
        $region148: #{tpu_custom_call.1} parent=116 // pred_region
          %s1871 = ssub.s32 128, 128
          %1872 = vsyncadd %s1863, %s1871
          %s1873 = smul.addr %s34, 128
          %s1874 = scalar_lea.hbm %s15, %s1873
          %s1876 = sshll.u32 %s1866, 4
          %s1877 = int_to_ptr.vmem [resolvable:$true] %s1876
          %1879 = dma.vmem_to_hbm [thread:$0]  %s1877, 128, %s1874, %s1863
        $region149: #{tpu_custom_call.1} parent=116 // pred_fallthru
          _
      $region117: #{tpu_custom_call.1} parent=5 // pred_fallthru
        _
      %p1880 = scmp.le.s32.totalorder 2, %s24
      // Predicated region
      $region150: #{tpu_custom_call.1} parent=5 // pred_check
        %p1881 = pneg %p1880
      $region151: #{tpu_custom_call.1} parent=5 // pred_check_branch
        %1883 = sbr.rel (%p1881) target = $region153
      $region152: #{tpu_custom_call.1} parent=5 // pred_region
        %s1884 = ssub.s32 %s24, 2
        // Predicated region
        $region154: #{tpu_custom_call.1} parent=152 // pred_check
          %p1885 = pneg %p458
        $region155: #{tpu_custom_call.1} parent=152 // pred_check_branch
          %1887 = sbr.rel (%p1885) target = $region157
        $region156: #{tpu_custom_call.1} parent=152 // pred_region
          %s1888 = sand.u32 %s443, 1
          %s1889 = scalar_lea.sflag [#allocation6], %s1888
          %s1890 = sand.u32 %s443, 1
          %s1891 = smul.addr %s1890, 8
          %s1892 = scalar_lea.vmem [#allocation5], %s1891
          %1893 = dma.done %s1889, 128
        $region157: #{tpu_custom_call.1} parent=152 // pred_fallthru
          _
      $region153: #{tpu_custom_call.1} parent=5 // pred_fallthru
        _
    $region6: #{tpu_custom_call.1} parent=1 // loop_footer
      %s28 = sadd.s32 1, %s24
    $region7: #{tpu_custom_call.1} parent=1 // loop_footer_branch
      %23 = sbr.rel target = $region3
    $region8: #{tpu_custom_call.1} parent=1 // loop_exit
      _
    %1894 = vsyncpa [#allocation6], 1
    %s1895 = scalar_lea.sflag [#allocation6], 1
    %1896 = vsyncpa %s1895, 1

</llo_original>
